<compile_context>
chip_gen: v7x
topology: tpu7x:2x2x1
jax: 0.10.0
libtpu: 0.0.40
codegen_flags: <defaults>
</compile_context>

<pallas_src>
import jax
import jax.numpy as jnp
from jax.experimental import pallas as pl
from jax.experimental.pallas import tpu as pltpu


# ----------------------------- Fused Pallas kernel -------------------------- #

def _decoder_kernel(text_ref,     # VMEM (B, 1)        int32 token ids
                    emb_ref,      # VMEM (V, E)        bf16 embedding table
                    hidden_ref,   # VMEM (L, B, H)     f32
                    cell_ref,     # VMEM (L, B, H)     f32
                    w_ref,        # VMEM (L, E+H, 4H)  bf16 [W_ih_t ; W_hh_t], gates [i|f|g|o]
                    b_ref,        # VMEM (L, 1, 4H)    f32  b_ih + b_hh
                    fcw_ref,      # VMEM (H, O)        bf16 fc1 weight (pre-transposed)
                    fcb_ref,      # VMEM (1, O)        f32  fc1 bias
                    logits_ref,   # VMEM (B, O)        f32  out
                    h_out_ref,    # VMEM (L, B, H)     f32  out (aliased with hidden)
                    c_out_ref,    # VMEM (L, B, H)     f32  out (aliased with cell)
                    xh_slab):     # VMEM (B, E+H)      bf16 scratch: [ x | h ]
    B = text_ref.shape[0]
    V, E = emb_ref.shape
    L, _, H = hidden_ref.shape

    # --- Embedding gather as a one-hot MXU matmul (table is VMEM-resident) ---
    ids = text_ref[...]                                        # (B, 1) int32
    iota = jax.lax.broadcasted_iota(jnp.int32, (B, V), 1)      # (B, V)
    onehot = (iota == ids).astype(jnp.bfloat16)                # exact 0/1
    x = jnp.dot(onehot, emb_ref[...],
                preferred_element_type=jnp.float32)            # (B, E) exact rows
    xh_slab[:, :E] = x.astype(jnp.bfloat16)

    # --- num_layers LSTM cells, one time step, all state resident in VMEM ----
    x_top = None
    for l in range(L):
        h = hidden_ref[l]                                      # (B, H) f32 (read before write)
        c = cell_ref[l]                                        # (B, H) f32
        xh_slab[:, E:] = h.astype(jnp.bfloat16)                # no per-layer concat
        gates = (jnp.dot(xh_slab[...], w_ref[l],
                         preferred_element_type=jnp.float32)
                 + b_ref[l])                                   # (B, 4H) f32, [i|f|g|o]
        i_g = jax.nn.sigmoid(gates[:, 0 * H:1 * H])
        f_g = jax.nn.sigmoid(gates[:, 1 * H:2 * H])
        g_g = jnp.tanh(gates[:, 2 * H:3 * H])
        o_g = jax.nn.sigmoid(gates[:, 3 * H:4 * H])
        c_new = f_g * c + i_g * g_g
        h_new = o_g * jnp.tanh(c_new)
        h_out_ref[l] = h_new
        c_out_ref[l] = c_new
        x_top = h_new.astype(jnp.bfloat16)
        if l + 1 < L:
            xh_slab[:, :E] = x_top                             # next layer input

    # --- fc1: logits = h_top @ W_fc_t + b_fc ---------------------------------
    logits_ref[...] = (
        jnp.dot(x_top, fcw_ref[...], preferred_element_type=jnp.float32)
        + fcb_ref[...])


# ---------------------------------- Wrapper --------------------------------- #

@jax.jit
def decoder_forward(text, hidden, cell, params):
    """Mirrors Decoder.forward(text, hidden, cell) in eval mode.

    Returns (logits (B, O), hidden (L, B, H), cell (L, B, H)).
    """
    L, B, H = hidden.shape
    V, E = params["embedding"].shape
    O = params["fc_w_t"].shape[1]

    vmem = pl.BlockSpec(memory_space=pltpu.MemorySpace.VMEM)

    flops = (2 * B * V * E                       # one-hot gather matmul
             + 2 * B * (E + H) * 4 * H * L       # gate matmuls
             + 2 * B * H * O)                    # fc1
    transcendentals = 5 * L * B * H              # 3 sigmoid + 2 tanh per layer
    bytes_accessed = (
        params["embedding"].size * 2 + params["w_cat_t"].size * 2
        + params["fc_w_t"].size * 2
        + 4 * (params["b"].size + params["fc_b"].size)
        + 4 * (2 * hidden.size + 2 * cell.size + B * O) + 4 * B)

    return pl.pallas_call(
        _decoder_kernel,
        out_shape=(
            jax.ShapeDtypeStruct((B, O), jnp.float32),
            jax.ShapeDtypeStruct((L, B, H), jnp.float32),
            jax.ShapeDtypeStruct((L, B, H), jnp.float32),
        ),
        in_specs=[vmem] * 8,
        out_specs=(vmem, vmem, vmem),
        scratch_shapes=[pltpu.VMEM((B, E + H), jnp.bfloat16)],
        # Write new hidden/cell state back into the incoming buffers.
        input_output_aliases={2: 1, 3: 2},
        compiler_params=pltpu.CompilerParams(vmem_limit_bytes=32 * 1024 * 1024),
        cost_estimate=pl.CostEstimate(flops=flops,
                                      transcendentals=transcendentals,
                                      bytes_accessed=bytes_accessed),
    )(text.reshape(B, 1), params["embedding"], hidden, cell,
      params["w_cat_t"], params["b"], params["fc_w_t"], params["fc_b"])


# --------------------------- Pure-JAX reference ------------------------------ #

def decoder_reference(text, hidden, cell, params):
    """Same math in plain JAX (same bf16 params) for a correctness check."""
    x = jnp.take(params["embedding"], text, axis=0)            # (B, E) bf16
    L, _, H = hidden.shape
    hs, cs = [], []
    for l in range(L):
        h = hidden[l]
        c = cell[l]
        xh = jnp.concatenate([x, h.astype(x.dtype)], axis=-1)
        gates = (jnp.dot(xh, params["w_cat_t"][l],
                         preferred_element_type=jnp.float32) + params["b"][l])
        i_g = jax.nn.sigmoid(gates[:, 0 * H:1 * H])
        f_g = jax.nn.sigmoid(gates[:, 1 * H:2 * H])
        g_g = jnp.tanh(gates[:, 2 * H:3 * H])
        o_g = jax.nn.sigmoid(gates[:, 3 * H:4 * H])
        c_new = f_g * c + i_g * g_g
        h_new = o_g * jnp.tanh(c_new)
        hs.append(h_new)
        cs.append(c_new)
        x = h_new.astype(x.dtype)
    logits = (jnp.dot(x, params["fc_w_t"], preferred_element_type=jnp.float32)
              + params["fc_b"])
    return logits, jnp.stack(hs, axis=0), jnp.stack(cs, axis=0)


# ------------------------- Deterministic param init -------------------------- #

def init_params(key, *, output_dim, embed_dim, hidden_dim, num_layers):
    assert embed_dim == hidden_dim, "stacked (L, E+H, 4H) layout assumes E == H"
    keys = jax.random.split(key, 3 + num_layers)
    k = float(hidden_dim) ** -0.5

    embedding = jax.random.normal(
        keys[0], (output_dim, embed_dim), jnp.float32).astype(jnp.bfloat16)

    w_list, b_list = [], []
    for layer in range(num_layers):
        in_dim = embed_dim if layer == 0 else hidden_dim
        kw0, kw1, kb0, kb1 = jax.random.split(keys[1 + layer], 4)
        # PyTorch stores W_ih as (4H, in); pre-transpose and stack with W_hh_t.
        w_ih_t = jax.random.uniform(kw0, (in_dim, 4 * hidden_dim),
                                    jnp.float32, -k, k)
        w_hh_t = jax.random.uniform(kw1, (hidden_dim, 4 * hidden_dim),
                                    jnp.float32, -k, k)
        w_list.append(jnp.concatenate([w_ih_t, w_hh_t], axis=0))   # (E+H, 4H)
        b_ih = jax.random.uniform(kb0, (1, 4 * hidden_dim), jnp.float32, -k, k)
        b_hh = jax.random.uniform(kb1, (1, 4 * hidden_dim), jnp.float32, -k, k)
        b_list.append(b_ih + b_hh)

    w_cat_t = jnp.stack(w_list, axis=0).astype(jnp.bfloat16)       # (L, E+H, 4H)
    b = jnp.stack(b_list, axis=0)                                  # (L, 1, 4H) f32

    fc_w_t = jax.random.uniform(keys[-2], (hidden_dim, output_dim),
                                jnp.float32, -k, k).astype(jnp.bfloat16)
    fc_b = jax.random.uniform(keys[-1], (1, output_dim), jnp.float32, -k, k)

    return {
        "embedding": embedding,   # (V, E)      bf16
        "w_cat_t": w_cat_t,       # (L, E+H, 4H) bf16
        "b": b,                   # (L, 1, 4H)  f32
        "fc_w_t": fc_w_t,         # (H, O)      bf16
        "fc_b": fc_b,             # (1, O)      f32
    }


# ------------------------------------ Main ----------------------------------- #

if __name__ == "__main__":
    # Small, TPU-tile-friendly sizes (lane dim multiples of 128, sublane of 8).
    BATCH = 8
    EMBED_DIM = 128      # args.enc_embed_dim
    HIDDEN_DIM = 128     # args.hidden_dim
    OUTPUT_DIM = 256     # args.output_dim (vocab)
    NUM_LAYERS = 2       # args.num_layers

    root = jax.random.PRNGKey(0)
    k_par, k_txt, k_h, k_c = jax.random.split(root, 4)

    params = init_params(
        k_par,
        output_dim=OUTPUT_DIM,
        embed_dim=EMBED_DIM,
        hidden_dim=HIDDEN_DIM,
        num_layers=NUM_LAYERS,
    )

    text = jax.random.randint(k_txt, (BATCH,), 0, OUTPUT_DIM, dtype=jnp.int32)
    hidden = jax.random.normal(k_h, (NUM_LAYERS, BATCH, HIDDEN_DIM), jnp.float32)
    cell = jax.random.normal(k_c, (NUM_LAYERS, BATCH, HIDDEN_DIM), jnp.float32)

    logits, hidden_out, cell_out = decoder_forward(text, hidden, cell, params)
    jax.block_until_ready((logits, hidden_out, cell_out))

    assert logits.shape == (BATCH, OUTPUT_DIM)
    assert hidden_out.shape == (NUM_LAYERS, BATCH, HIDDEN_DIM)
    assert cell_out.shape == (NUM_LAYERS, BATCH, HIDDEN_DIM)

    # Correctness check against a pure-JAX reference using the same bf16 params.
    ref_logits, ref_h, ref_c = decoder_reference(text, hidden, cell, params)
    assert bool(jnp.allclose(logits, ref_logits, atol=2e-2, rtol=2e-2))
    assert bool(jnp.allclose(hidden_out, ref_h, atol=2e-2, rtol=2e-2))
    assert bool(jnp.allclose(cell_out, ref_c, atol=2e-2, rtol=2e-2))

    print("KERNEL_OK")
</pallas_src>

<mosaic_0001>
module attributes {stable_mosaic.version = 11 : i64} {
  func.func @_decoder_kernel(%arg0: memref<8x1xi32, #tpu.memory_space<vmem>>, %arg1: memref<256x128xbf16, #tpu.memory_space<vmem>>, %arg2: memref<2x8x128xf32, #tpu.memory_space<vmem>>, %arg3: memref<2x8x128xf32, #tpu.memory_space<vmem>>, %arg4: memref<2x256x512xbf16, #tpu.memory_space<vmem>>, %arg5: memref<2x1x512xf32, #tpu.memory_space<vmem>>, %arg6: memref<128x256xbf16, #tpu.memory_space<vmem>>, %arg7: memref<1x256xf32, #tpu.memory_space<vmem>>, %arg8: memref<8x256xf32, #tpu.memory_space<vmem>>, %arg9: memref<2x8x128xf32, #tpu.memory_space<vmem>>, %arg10: memref<2x8x128xf32, #tpu.memory_space<vmem>>, %arg11: memref<8x256xbf16, #tpu.memory_space<vmem>>) attributes {dimension_semantics = [], scalar_prefetch = 0 : i64, scratch_operands = 1 : i64, tpu.core_type = #tpu.core_type<tc>} {
    %c0 = arith.constant 0 : index
    %c0_0 = arith.constant 0 : index
    %0 = vector.load %arg0[%c0, %c0_0] : memref<8x1xi32, #tpu.memory_space<vmem>>, vector<8x1xi32>
    %1 = tpu.iota {dimensions = array<i32: 1>} : vector<8x256xi32>
    %2 = vector.broadcast %0 : vector<8x1xi32> to vector<8x256xi32>
    %3 = arith.cmpi eq, %1, %2 : vector<8x256xi32>
    %4 = arith.extui %3 : vector<8x256xi1> to vector<8x256xi32>
    %5 = arith.sitofp %4 : vector<8x256xi32> to vector<8x256xf32>
    %6 = arith.truncf %5 : vector<8x256xf32> to vector<8x256xbf16>
    %c0_1 = arith.constant 0 : index
    %c0_2 = arith.constant 0 : index
    %7 = vector.load %arg1[%c0_1, %c0_2] : memref<256x128xbf16, #tpu.memory_space<vmem>>, vector<256x128xbf16>
    %cst = arith.constant dense<0.000000e+00> : vector<8x128xf32>
    %8 = tpu.matmul %6, %7, %cst {dimension_numbers = #tpu.dot_dimension_numbers<[1], [0], [0], [1], [0, 0, 1, 1], [], []>} : vector<8x256xbf16>, vector<256x128xbf16>, vector<8x128xf32> -> vector<8x128xf32>
    %9 = arith.truncf %8 : vector<8x128xf32> to vector<8x128xbf16>
    %c0_3 = arith.constant 0 : index
    %c0_4 = arith.constant 0 : index
    %10 = vector.load %arg11[%c0_3, %c0_4] : memref<8x256xbf16, #tpu.memory_space<vmem>>, vector<8x128xbf16>
    tpu.vector_store %arg11[%c0_3, %c0_4], %9 {strides = array<i32>} : memref<8x256xbf16, #tpu.memory_space<vmem>>, vector<8x128xbf16>,
    %c0_5 = arith.constant 0 : index
    %c0_6 = arith.constant 0 : index
    %c0_7 = arith.constant 0 : index
    %11 = vector.load %arg2[%c0_5, %c0_6, %c0_7] : memref<2x8x128xf32, #tpu.memory_space<vmem>>, vector<1x8x128xf32>
    %12 = vector.shape_cast %11 : vector<1x8x128xf32> to vector<8x128xf32>
    %c0_8 = arith.constant 0 : index
    %c0_9 = arith.constant 0 : index
    %c0_10 = arith.constant 0 : index
    %13 = vector.load %arg3[%c0_8, %c0_9, %c0_10] : memref<2x8x128xf32, #tpu.memory_space<vmem>>, vector<1x8x128xf32>
    %14 = vector.shape_cast %13 : vector<1x8x128xf32> to vector<8x128xf32>
    %15 = arith.truncf %12 : vector<8x128xf32> to vector<8x128xbf16>
    %c0_11 = arith.constant 0 : index
    %c128 = arith.constant 128 : index
    %16 = vector.load %arg11[%c0_11, %c128] : memref<8x256xbf16, #tpu.memory_space<vmem>>, vector<8x128xbf16>
    tpu.vector_store %arg11[%c0_11, %c128], %15 {strides = array<i32>} : memref<8x256xbf16, #tpu.memory_space<vmem>>, vector<8x128xbf16>,
    %c0_12 = arith.constant 0 : index
    %c0_13 = arith.constant 0 : index
    %17 = vector.load %arg11[%c0_12, %c0_13] : memref<8x256xbf16, #tpu.memory_space<vmem>>, vector<8x256xbf16>
    %c0_14 = arith.constant 0 : index
    %c0_15 = arith.constant 0 : index
    %c0_16 = arith.constant 0 : index
    %18 = vector.load %arg4[%c0_14, %c0_15, %c0_16] : memref<2x256x512xbf16, #tpu.memory_space<vmem>>, vector<1x256x512xbf16>
    %19 = vector.shape_cast %18 : vector<1x256x512xbf16> to vector<256x512xbf16>
    %cst_17 = arith.constant dense<0.000000e+00> : vector<8x512xf32>
    %20 = tpu.matmul %17, %19, %cst_17 {dimension_numbers = #tpu.dot_dimension_numbers<[1], [0], [0], [1], [0, 0, 1, 1], [], []>} : vector<8x256xbf16>, vector<256x512xbf16>, vector<8x512xf32> -> vector<8x512xf32>
    %c0_18 = arith.constant 0 : index
    %c0_19 = arith.constant 0 : index
    %c0_20 = arith.constant 0 : index
    %21 = vector.load %arg5[%c0_18, %c0_19, %c0_20] : memref<2x1x512xf32, #tpu.memory_space<vmem>>, vector<1x1x512xf32>
    %22 = vector.shape_cast %21 : vector<1x1x512xf32> to vector<1x512xf32>
    %23 = vector.broadcast %22 : vector<1x512xf32> to vector<8x512xf32>
    %24 = arith.addf %20, %23 : vector<8x512xf32>
    %25 = vector.extract_strided_slice %24 {offsets = [0, 0], sizes = [8, 128], strides = [1, 1]} : vector<8x512xf32> to vector<8x128xf32>
    %26 = arith.negf %25 : vector<8x128xf32>
    %27 = math.exp %26 : vector<8x128xf32>
    %cst_21 = arith.constant 1.000000e+00 : f32
    %28 = vector.broadcast %cst_21 : f32 to vector<8x128xf32>
    %29 = arith.addf %28, %27 : vector<8x128xf32>
    %30 = arith.divf %28, %29 : vector<8x128xf32>
    %31 = vector.extract_strided_slice %24 {offsets = [0, 128], sizes = [8, 128], strides = [1, 1]} : vector<8x512xf32> to vector<8x128xf32>
    %32 = arith.negf %31 : vector<8x128xf32>
    %33 = math.exp %32 : vector<8x128xf32>
    %cst_22 = arith.constant 1.000000e+00 : f32
    %34 = vector.broadcast %cst_22 : f32 to vector<8x128xf32>
    %35 = arith.addf %34, %33 : vector<8x128xf32>
    %36 = arith.divf %34, %35 : vector<8x128xf32>
    %37 = vector.extract_strided_slice %24 {offsets = [0, 256], sizes = [8, 128], strides = [1, 1]} : vector<8x512xf32> to vector<8x128xf32>
    %38 = math.tanh %37 : vector<8x128xf32>
    %39 = vector.extract_strided_slice %24 {offsets = [0, 384], sizes = [8, 128], strides = [1, 1]} : vector<8x512xf32> to vector<8x128xf32>
    %40 = arith.negf %39 : vector<8x128xf32>
    %41 = math.exp %40 : vector<8x128xf32>
    %cst_23 = arith.constant 1.000000e+00 : f32
    %42 = vector.broadcast %cst_23 : f32 to vector<8x128xf32>
    %43 = arith.addf %42, %41 : vector<8x128xf32>
    %44 = arith.divf %42, %43 : vector<8x128xf32>
    %45 = arith.mulf %36, %14 : vector<8x128xf32>
    %46 = arith.mulf %30, %38 : vector<8x128xf32>
    %47 = arith.addf %45, %46 : vector<8x128xf32>
    %48 = math.tanh %47 : vector<8x128xf32>
    %49 = arith.mulf %44, %48 : vector<8x128xf32>
    %c0_24 = arith.constant 0 : index
    %c0_25 = arith.constant 0 : index
    %c0_26 = arith.constant 0 : index
    %50 = vector.load %arg9[%c0_24, %c0_25, %c0_26] : memref<2x8x128xf32, #tpu.memory_space<vmem>>, vector<1x8x128xf32>
    %51 = vector.shape_cast %50 : vector<1x8x128xf32> to vector<8x128xf32>
    %52 = vector.shape_cast %49 : vector<8x128xf32> to vector<1x8x128xf32>
    tpu.vector_store %arg9[%c0_24, %c0_25, %c0_26], %52 {strides = array<i32>} : memref<2x8x128xf32, #tpu.memory_space<vmem>>, vector<1x8x128xf32>,
    %c0_27 = arith.constant 0 : index
    %c0_28 = arith.constant 0 : index
    %c0_29 = arith.constant 0 : index
    %53 = vector.load %arg10[%c0_27, %c0_28, %c0_29] : memref<2x8x128xf32, #tpu.memory_space<vmem>>, vector<1x8x128xf32>
    %54 = vector.shape_cast %53 : vector<1x8x128xf32> to vector<8x128xf32>
    %55 = vector.shape_cast %47 : vector<8x128xf32> to vector<1x8x128xf32>
    tpu.vector_store %arg10[%c0_27, %c0_28, %c0_29], %55 {strides = array<i32>} : memref<2x8x128xf32, #tpu.memory_space<vmem>>, vector<1x8x128xf32>,
    %56 = arith.truncf %49 : vector<8x128xf32> to vector<8x128xbf16>
    %c0_30 = arith.constant 0 : index
    %c0_31 = arith.constant 0 : index
    %57 = vector.load %arg11[%c0_30, %c0_31] : memref<8x256xbf16, #tpu.memory_space<vmem>>, vector<8x128xbf16>
    tpu.vector_store %arg11[%c0_30, %c0_31], %56 {strides = array<i32>} : memref<8x256xbf16, #tpu.memory_space<vmem>>, vector<8x128xbf16>,
    %c1 = arith.constant 1 : index
    %c0_32 = arith.constant 0 : index
    %c0_33 = arith.constant 0 : index
    %58 = vector.load %arg2[%c1, %c0_32, %c0_33] : memref<2x8x128xf32, #tpu.memory_space<vmem>>, vector<1x8x128xf32>
    %59 = vector.shape_cast %58 : vector<1x8x128xf32> to vector<8x128xf32>
    %c1_34 = arith.constant 1 : index
    %c0_35 = arith.constant 0 : index
    %c0_36 = arith.constant 0 : index
    %60 = vector.load %arg3[%c1_34, %c0_35, %c0_36] : memref<2x8x128xf32, #tpu.memory_space<vmem>>, vector<1x8x128xf32>
    %61 = vector.shape_cast %60 : vector<1x8x128xf32> to vector<8x128xf32>
    %62 = arith.truncf %59 : vector<8x128xf32> to vector<8x128xbf16>
    %c0_37 = arith.constant 0 : index
    %c128_38 = arith.constant 128 : index
    %63 = vector.load %arg11[%c0_37, %c128_38] : memref<8x256xbf16, #tpu.memory_space<vmem>>, vector<8x128xbf16>
    tpu.vector_store %arg11[%c0_37, %c128_38], %62 {strides = array<i32>} : memref<8x256xbf16, #tpu.memory_space<vmem>>, vector<8x128xbf16>,
    %c0_39 = arith.constant 0 : index
    %c0_40 = arith.constant 0 : index
    %64 = vector.load %arg11[%c0_39, %c0_40] : memref<8x256xbf16, #tpu.memory_space<vmem>>, vector<8x256xbf16>
    %c1_41 = arith.constant 1 : index
    %c0_42 = arith.constant 0 : index
    %c0_43 = arith.constant 0 : index
    %65 = vector.load %arg4[%c1_41, %c0_42, %c0_43] : memref<2x256x512xbf16, #tpu.memory_space<vmem>>, vector<1x256x512xbf16>
    %66 = vector.shape_cast %65 : vector<1x256x512xbf16> to vector<256x512xbf16>
    %cst_44 = arith.constant dense<0.000000e+00> : vector<8x512xf32>
    %67 = tpu.matmul %64, %66, %cst_44 {dimension_numbers = #tpu.dot_dimension_numbers<[1], [0], [0], [1], [0, 0, 1, 1], [], []>} : vector<8x256xbf16>, vector<256x512xbf16>, vector<8x512xf32> -> vector<8x512xf32>
    %c1_45 = arith.constant 1 : index
    %c0_46 = arith.constant 0 : index
    %c0_47 = arith.constant 0 : index
    %68 = vector.load %arg5[%c1_45, %c0_46, %c0_47] : memref<2x1x512xf32, #tpu.memory_space<vmem>>, vector<1x1x512xf32>
    %69 = vector.shape_cast %68 : vector<1x1x512xf32> to vector<1x512xf32>
    %70 = vector.broadcast %69 : vector<1x512xf32> to vector<8x512xf32>
    %71 = arith.addf %67, %70 : vector<8x512xf32>
    %72 = vector.extract_strided_slice %71 {offsets = [0, 0], sizes = [8, 128], strides = [1, 1]} : vector<8x512xf32> to vector<8x128xf32>
    %73 = arith.negf %72 : vector<8x128xf32>
    %74 = math.exp %73 : vector<8x128xf32>
    %cst_48 = arith.constant 1.000000e+00 : f32
    %75 = vector.broadcast %cst_48 : f32 to vector<8x128xf32>
    %76 = arith.addf %75, %74 : vector<8x128xf32>
    %77 = arith.divf %75, %76 : vector<8x128xf32>
    %78 = vector.extract_strided_slice %71 {offsets = [0, 128], sizes = [8, 128], strides = [1, 1]} : vector<8x512xf32> to vector<8x128xf32>
    %79 = arith.negf %78 : vector<8x128xf32>
    %80 = math.exp %79 : vector<8x128xf32>
    %cst_49 = arith.constant 1.000000e+00 : f32
    %81 = vector.broadcast %cst_49 : f32 to vector<8x128xf32>
    %82 = arith.addf %81, %80 : vector<8x128xf32>
    %83 = arith.divf %81, %82 : vector<8x128xf32>
    %84 = vector.extract_strided_slice %71 {offsets = [0, 256], sizes = [8, 128], strides = [1, 1]} : vector<8x512xf32> to vector<8x128xf32>
    %85 = math.tanh %84 : vector<8x128xf32>
    %86 = vector.extract_strided_slice %71 {offsets = [0, 384], sizes = [8, 128], strides = [1, 1]} : vector<8x512xf32> to vector<8x128xf32>
    %87 = arith.negf %86 : vector<8x128xf32>
    %88 = math.exp %87 : vector<8x128xf32>
    %cst_50 = arith.constant 1.000000e+00 : f32
    %89 = vector.broadcast %cst_50 : f32 to vector<8x128xf32>
    %90 = arith.addf %89, %88 : vector<8x128xf32>
    %91 = arith.divf %89, %90 : vector<8x128xf32>
    %92 = arith.mulf %83, %61 : vector<8x128xf32>
    %93 = arith.mulf %77, %85 : vector<8x128xf32>
    %94 = arith.addf %92, %93 : vector<8x128xf32>
    %95 = math.tanh %94 : vector<8x128xf32>
    %96 = arith.mulf %91, %95 : vector<8x128xf32>
    %c1_51 = arith.constant 1 : index
    %c0_52 = arith.constant 0 : index
    %c0_53 = arith.constant 0 : index
    %97 = vector.load %arg9[%c1_51, %c0_52, %c0_53] : memref<2x8x128xf32, #tpu.memory_space<vmem>>, vector<1x8x128xf32>
    %98 = vector.shape_cast %97 : vector<1x8x128xf32> to vector<8x128xf32>
    %99 = vector.shape_cast %96 : vector<8x128xf32> to vector<1x8x128xf32>
    tpu.vector_store %arg9[%c1_51, %c0_52, %c0_53], %99 {strides = array<i32>} : memref<2x8x128xf32, #tpu.memory_space<vmem>>, vector<1x8x128xf32>,
    %c1_54 = arith.constant 1 : index
    %c0_55 = arith.constant 0 : index
    %c0_56 = arith.constant 0 : index
    %100 = vector.load %arg10[%c1_54, %c0_55, %c0_56] : memref<2x8x128xf32, #tpu.memory_space<vmem>>, vector<1x8x128xf32>
    %101 = vector.shape_cast %100 : vector<1x8x128xf32> to vector<8x128xf32>
    %102 = vector.shape_cast %94 : vector<8x128xf32> to vector<1x8x128xf32>
    tpu.vector_store %arg10[%c1_54, %c0_55, %c0_56], %102 {strides = array<i32>} : memref<2x8x128xf32, #tpu.memory_space<vmem>>, vector<1x8x128xf32>,
    %103 = arith.truncf %96 : vector<8x128xf32> to vector<8x128xbf16>
    %c0_57 = arith.constant 0 : index
    %c0_58 = arith.constant 0 : index
    %104 = vector.load %arg6[%c0_57, %c0_58] : memref<128x256xbf16, #tpu.memory_space<vmem>>, vector<128x256xbf16>
    %cst_59 = arith.constant dense<0.000000e+00> : vector<8x256xf32>
    %105 = tpu.matmul %103, %104, %cst_59 {dimension_numbers = #tpu.dot_dimension_numbers<[1], [0], [0], [1], [0, 0, 1, 1], [], []>} : vector<8x128xbf16>, vector<128x256xbf16>, vector<8x256xf32> -> vector<8x256xf32>
    %c0_60 = arith.constant 0 : index
    %c0_61 = arith.constant 0 : index
    %106 = vector.load %arg7[%c0_60, %c0_61] : memref<1x256xf32, #tpu.memory_space<vmem>>, vector<1x256xf32>
    %107 = vector.broadcast %106 : vector<1x256xf32> to vector<8x256xf32>
    %108 = arith.addf %105, %107 : vector<8x256xf32>
    %c0_62 = arith.constant 0 : index
    %c0_63 = arith.constant 0 : index
    %109 = vector.load %arg8[%c0_62, %c0_63] : memref<8x256xf32, #tpu.memory_space<vmem>>, vector<8x256xf32>
    tpu.vector_store %arg8[%c0_62, %c0_63], %108 {strides = array<i32>} : memref<8x256xf32, #tpu.memory_space<vmem>>, vector<8x256xf32>,
    return
  }
}

</mosaic_0001>

<llo_original>
// kernel: decoder_forward.1
$region0: #{decoder_forward.1}
  #allocation0 [shape = 'u32[]', space=smem, size = 0x4, offset = 0x4, fixed_abs, tag = 'smem constant byte address 0x4 - core index']
  #allocation1 [shape = 'u32[144,128]{1,0:T(1,128)}', space=vmem, size = 0x12000, scoped, tag = 'internal scratch']
  #allocation2 [shape = 'bf16[8,256]{1,0:T(8,128)(2,1)}', space=vmem, size = 0x1000, scoped, tag = 'scratch operand']
  %s0 = inlined_call_operand.vmem [shape: s32[8,1], index: 0, kind: input, shape index: {}]
  %s1 = inlined_call_operand.hbm [shape: bf16[256,128], index: 1, kind: input, shape index: {}]
  %s2 = inlined_call_operand.hbm [shape: f32[2,8,128], index: 2, kind: input, shape index: {}, may-alias: {2,9}]
  %s3 = inlined_call_operand.hbm [shape: f32[2,8,128], index: 3, kind: input, shape index: {}, may-alias: {3,10}]
  %s4 = inlined_call_operand.hbm [shape: bf16[2,256,512], index: 4, kind: input, shape index: {}]
  %s5 = inlined_call_operand.vmem [shape: f32[2,1,512], index: 5, kind: input, shape index: {}]
  %s6 = inlined_call_operand.hbm [shape: bf16[128,256], index: 6, kind: input, shape index: {}]
  %s7 = inlined_call_operand.vmem [shape: f32[1,256], index: 7, kind: input, shape index: {}]
  %s8 = inlined_call_operand.hbm [shape: f32[8,256], index: 8, kind: output, shape index: {0}]
  %s9 = inlined_call_operand.hbm [shape: f32[2,8,128], index: 9, kind: output, shape index: {1}, may-alias: {2,9}]
  %s10 = inlined_call_operand.hbm [shape: f32[2,8,128], index: 10, kind: output, shape index: {2}, may-alias: {3,10}]
  %11 = xla_tuple %s8, %s9, %s10
  %s12 = sld [smem:[#allocation0]]
  $region78: #{decoder_forward.1} parent=0
    _
  %s14 = ssub.s32 1, %s12
  %s15 = scalar_select 0, %s14, %s12
  $region1: #{decoder_forward.1} parent=0
    #allocation3 [shape = 'u8[65536]{0}', space=vmem, size = 0x10000, scoped, tag = 'input window, operand 1, single buffered']
    #allocation4 [shape = 's32[1]{0}', space=sflag, size = 0x4, scoped, tag = 'scoped memory for decoder_forward.1']
    #allocation5 [shape = 's32[1]{0}', space=sflag, size = 0x4, scoped, tag = 'scoped memory for decoder_forward.1']
    #allocation6 [shape = 'u8[8192]{0}', space=vmem, size = 0x2000, scoped, tag = 'input window, operand 2, single buffered']
    #allocation7 [shape = 's32[1]{0}', space=sflag, size = 0x4, scoped, tag = 'scoped memory for decoder_forward.1']
    #allocation8 [shape = 'u8[8192]{0}', space=vmem, size = 0x2000, scoped, tag = 'input window, operand 3, single buffered']
    #allocation9 [shape = 'u8[524288]{0}', space=vmem, size = 0x80000, scoped, tag = 'input window, operand 4, single buffered']
    #allocation10 [shape = 's32[1]{0}', space=sflag, size = 0x4, scoped, tag = 'scoped memory for decoder_forward.1']
    #allocation11 [shape = 'u8[65536]{0}', space=vmem, size = 0x10000, scoped, tag = 'input window, operand 6, single buffered']
    #allocation12 [shape = 'u8[8192]{0}', space=vmem, size = 0x2000, scoped, tag = 'output window, operand 0, single buffered']
    #allocation13 [shape = 'u8[8192]{0}', space=vmem, size = 0x2000, scoped, tag = 'output window, operand 1, single buffered']
    #allocation14 [shape = 's32[1]{0}', space=sflag, size = 0x4, scoped, tag = 'scoped memory for decoder_forward.1']
    #allocation15 [shape = 'u8[8192]{0}', space=vmem, size = 0x2000, scoped, tag = 'output window, operand 2, single buffered']
    %16 = vsyncpa [#allocation4], 0
    %17 = vsyncpa [#allocation7], 0
    %18 = vsyncpa [#allocation10], 0
    %19 = vsyncpa [#allocation5], 0
    %20 = vsyncpa [#allocation14], 0
    // Predicated region
    $region2: #{decoder_forward.1} parent=1 // pred_check
      _
    $region3: #{decoder_forward.1} parent=1 // pred_check_branch
      %22 = sbr.rel (0) target = $region5
    $region4: #{decoder_forward.1} parent=1 // pred_region
      _
    $region5: #{decoder_forward.1} parent=1 // pred_fallthru
      _
    // Predicated region
    $region6: #{decoder_forward.1} parent=1 // pred_check
      _
    $region7: #{decoder_forward.1} parent=1 // pred_check_branch
      %24 = sbr.rel (0) target = $region9
    $region8: #{decoder_forward.1} parent=1 // pred_region
      %s26 = ssub.s32 2048, 2048
      %27 = vsyncadd [#allocation4], %s26
      %s28 = sshll.u32 [#allocation3], 4
      %s29 = int_to_ptr.vmem [resolvable:$true] %s28
      %34 = dma.hbm_to_vmem [thread:$0]  %s1, 2048, %s29, [#allocation4], 64, 64, 4
    $region9: #{decoder_forward.1} parent=1 // pred_fallthru
      _
    // Predicated region
    $region10: #{decoder_forward.1} parent=1 // pred_check
      _
    $region11: #{decoder_forward.1} parent=1 // pred_check_branch
      %36 = sbr.rel (0) target = $region13
    $region12: #{decoder_forward.1} parent=1 // pred_region
      %s38 = ssub.s32 256, 256
      %39 = vsyncadd [#allocation7], %s38
      %s40 = sshll.u32 [#allocation6], 4
      %s41 = int_to_ptr.vmem [resolvable:$true] %s40
      %46 = dma.hbm_to_vmem [thread:$0]  %s2, 256, %s41, [#allocation7], 128, 128, 8
    $region13: #{decoder_forward.1} parent=1 // pred_fallthru
      _
    // Predicated region
    $region14: #{decoder_forward.1} parent=1 // pred_check
      _
    $region15: #{decoder_forward.1} parent=1 // pred_check_branch
      %48 = sbr.rel (0) target = $region17
    $region16: #{decoder_forward.1} parent=1 // pred_region
      %s50 = ssub.s32 256, 256
      %51 = vsyncadd [#allocation7], %s50
      %s52 = sshll.u32 [#allocation8], 4
      %s53 = int_to_ptr.vmem [resolvable:$true] %s52
      %58 = dma.hbm_to_vmem [thread:$0]  %s3, 256, %s53, [#allocation7], 128, 128, 8
    $region17: #{decoder_forward.1} parent=1 // pred_fallthru
      _
    // Predicated region
    $region18: #{decoder_forward.1} parent=1 // pred_check
      _
    $region19: #{decoder_forward.1} parent=1 // pred_check_branch
      %60 = sbr.rel (0) target = $region21
    $region20: #{decoder_forward.1} parent=1 // pred_region
      %s62 = ssub.s32 16384, 16384
      %63 = vsyncadd [#allocation10], %s62
      %s64 = sshll.u32 [#allocation9], 4
      %s65 = int_to_ptr.vmem [resolvable:$true] %s64
      %70 = dma.hbm_to_vmem [thread:$0]  %s4, 16384, %s65, [#allocation10], 256, 256, 16
    $region21: #{decoder_forward.1} parent=1 // pred_fallthru
      _
    // Predicated region
    $region22: #{decoder_forward.1} parent=1 // pred_check
      _
    $region23: #{decoder_forward.1} parent=1 // pred_check_branch
      %72 = sbr.rel (0) target = $region25
    $region24: #{decoder_forward.1} parent=1 // pred_region
      _
    $region25: #{decoder_forward.1} parent=1 // pred_fallthru
      _
    // Predicated region
    $region26: #{decoder_forward.1} parent=1 // pred_check
      _
    $region27: #{decoder_forward.1} parent=1 // pred_check_branch
      %74 = sbr.rel (0) target = $region29
    $region28: #{decoder_forward.1} parent=1 // pred_region
      %s76 = ssub.s32 2048, 2048
      %77 = vsyncadd [#allocation10], %s76
      %s78 = sshll.u32 [#allocation11], 4
      %s79 = int_to_ptr.vmem [resolvable:$true] %s78
      %84 = dma.hbm_to_vmem [thread:$0]  %s6, 2048, %s79, [#allocation10], 128, 128, 8
    $region29: #{decoder_forward.1} parent=1 // pred_fallthru
      _
    // Predicated region
    $region30: #{decoder_forward.1} parent=1 // pred_check
      _
    $region31: #{decoder_forward.1} parent=1 // pred_check_branch
      %86 = sbr.rel (0) target = $region33
    $region32: #{decoder_forward.1} parent=1 // pred_region
      _
    $region33: #{decoder_forward.1} parent=1 // pred_fallthru
      _
    // Predicated region
    $region34: #{decoder_forward.1} parent=1 // pred_check
      _
    $region35: #{decoder_forward.1} parent=1 // pred_check_branch
      %88 = sbr.rel (0) target = $region37
    $region36: #{decoder_forward.1} parent=1 // pred_region
      %89 = dma.done [#allocation4], 2048
    $region37: #{decoder_forward.1} parent=1 // pred_fallthru
      _
    // Predicated region
    $region38: #{decoder_forward.1} parent=1 // pred_check
      _
    $region39: #{decoder_forward.1} parent=1 // pred_check_branch
      %91 = sbr.rel (0) target = $region41
    $region40: #{decoder_forward.1} parent=1 // pred_region
      %92 = dma.done [#allocation7], 256
    $region41: #{decoder_forward.1} parent=1 // pred_fallthru
      _
    // Predicated region
    $region42: #{decoder_forward.1} parent=1 // pred_check
      _
    $region43: #{decoder_forward.1} parent=1 // pred_check_branch
      %94 = sbr.rel (0) target = $region45
    $region44: #{decoder_forward.1} parent=1 // pred_region
      %95 = dma.done [#allocation7], 256
    $region45: #{decoder_forward.1} parent=1 // pred_fallthru
      _
    // Predicated region
    $region46: #{decoder_forward.1} parent=1 // pred_check
      _
    $region47: #{decoder_forward.1} parent=1 // pred_check_branch
      %97 = sbr.rel (0) target = $region49
    $region48: #{decoder_forward.1} parent=1 // pred_region
      %98 = dma.done [#allocation10], 16384
    $region49: #{decoder_forward.1} parent=1 // pred_fallthru
      _
    // Predicated region
    $region50: #{decoder_forward.1} parent=1 // pred_check
      _
    $region51: #{decoder_forward.1} parent=1 // pred_check_branch
      %100 = sbr.rel (0) target = $region53
    $region52: #{decoder_forward.1} parent=1 // pred_region
      %101 = dma.done [#allocation10], 2048
    $region53: #{decoder_forward.1} parent=1 // pred_fallthru
      _
    %v103 = vld [vmem:[%s0] sm:$0xff]
    %v104 = vlaneseq
    %v105 = vand.u32 %v104, 127
    %v106 = vadd.s32 %v105, 128
    %107 = vset.pattern.permute.xlu0 0
    %108 = vperm.xlu0 %107, %v103
    %v109 = vpop.permute.xlu0 %108
    %vm110 = vcmp.eq.s32.totalorder %v105, %v109
    %vm111 = vcmp.eq.s32.totalorder %v106, %v109
    %v112 = vsel %vm110, 1, 0
    %v113 = vsel %vm111, 1, 0
    %v114 = vcvt.s32.f32 %v112
    %v115 = vcvt.s32.f32 %v113
    %v116 = vpack.c.bf16 %v114, %v114
    %v117 = vpack.c.bf16 %v115, %v115
    %v118 = vld [vmem:[#allocation3] sm:$0xf]
    %v119 = vld [vmem:[#allocation3 + $0x4] sm:$0xf]
    %v120 = vld [vmem:[#allocation3 + $0x8] sm:$0xf]
    %v121 = vld [vmem:[#allocation3 + $0xc] sm:$0xf]
    %v122 = vld [vmem:[#allocation3 + $0x10] sm:$0xf]
    %v123 = vld [vmem:[#allocation3 + $0x14] sm:$0xf]
    %v124 = vld [vmem:[#allocation3 + $0x18] sm:$0xf]
    %v125 = vld [vmem:[#allocation3 + $0x1c] sm:$0xf]
    %v126 = vld [vmem:[#allocation3 + $0x20] sm:$0xf]
    %v127 = vld [vmem:[#allocation3 + $0x24] sm:$0xf]
    %v128 = vld [vmem:[#allocation3 + $0x28] sm:$0xf]
    %v129 = vld [vmem:[#allocation3 + $0x2c] sm:$0xf]
    %v130 = vld [vmem:[#allocation3 + $0x30] sm:$0xf]
    %v131 = vld [vmem:[#allocation3 + $0x34] sm:$0xf]
    %v132 = vld [vmem:[#allocation3 + $0x38] sm:$0xf]
    %v133 = vld [vmem:[#allocation3 + $0x3c] sm:$0xf]
    %v134 = vld [vmem:[#allocation3 + $0x40] sm:$0xf]
    %v135 = vld [vmem:[#allocation3 + $0x44] sm:$0xf]
    %v136 = vld [vmem:[#allocation3 + $0x48] sm:$0xf]
    %v137 = vld [vmem:[#allocation3 + $0x4c] sm:$0xf]
    %v138 = vld [vmem:[#allocation3 + $0x50] sm:$0xf]
    %v139 = vld [vmem:[#allocation3 + $0x54] sm:$0xf]
    %v140 = vld [vmem:[#allocation3 + $0x58] sm:$0xf]
    %v141 = vld [vmem:[#allocation3 + $0x5c] sm:$0xf]
    %v142 = vld [vmem:[#allocation3 + $0x60] sm:$0xf]
    %v143 = vld [vmem:[#allocation3 + $0x64] sm:$0xf]
    %v144 = vld [vmem:[#allocation3 + $0x68] sm:$0xf]
    %v145 = vld [vmem:[#allocation3 + $0x6c] sm:$0xf]
    %v146 = vld [vmem:[#allocation3 + $0x70] sm:$0xf]
    %v147 = vld [vmem:[#allocation3 + $0x74] sm:$0xf]
    %v148 = vld [vmem:[#allocation3 + $0x78] sm:$0xf]
    %v149 = vld [vmem:[#allocation3 + $0x7c] sm:$0xf]
    %v182 = vunpack.c.l.b16 %v118
    %v183 = vunpack.c.l.b16 %v119
    %v184 = vunpack.c.l.b16 %v120
    %v185 = vunpack.c.l.b16 %v121
    %v186 = vunpack.c.l.b16 %v122
    %v187 = vunpack.c.l.b16 %v123
    %v188 = vunpack.c.l.b16 %v124
    %v189 = vunpack.c.l.b16 %v125
    %v190 = vunpack.c.l.b16 %v126
    %v191 = vunpack.c.l.b16 %v127
    %v192 = vunpack.c.l.b16 %v128
    %v193 = vunpack.c.l.b16 %v129
    %v194 = vunpack.c.l.b16 %v130
    %v195 = vunpack.c.l.b16 %v131
    %v196 = vunpack.c.l.b16 %v132
    %v197 = vunpack.c.l.b16 %v133
    %v198 = vunpack.c.l.b16 %v134
    %v199 = vunpack.c.l.b16 %v135
    %v200 = vunpack.c.l.b16 %v136
    %v201 = vunpack.c.l.b16 %v137
    %v202 = vunpack.c.l.b16 %v138
    %v203 = vunpack.c.l.b16 %v139
    %v204 = vunpack.c.l.b16 %v140
    %v205 = vunpack.c.l.b16 %v141
    %v206 = vunpack.c.l.b16 %v142
    %v207 = vunpack.c.l.b16 %v143
    %v208 = vunpack.c.l.b16 %v144
    %v209 = vunpack.c.l.b16 %v145
    %v210 = vunpack.c.l.b16 %v146
    %v211 = vunpack.c.l.b16 %v147
    %v212 = vunpack.c.l.b16 %v148
    %v213 = vunpack.c.l.b16 %v149
    %v214 = vpack.c.b16 %v183, %v182
    %v215 = vpack.c.b16 %v185, %v184
    %v216 = vpack.c.b16 %v187, %v186
    %v217 = vpack.c.b16 %v189, %v188
    %v218 = vpack.c.b16 %v191, %v190
    %v219 = vpack.c.b16 %v193, %v192
    %v220 = vpack.c.b16 %v195, %v194
    %v221 = vpack.c.b16 %v197, %v196
    %v222 = vpack.c.b16 %v199, %v198
    %v223 = vpack.c.b16 %v201, %v200
    %v224 = vpack.c.b16 %v203, %v202
    %v225 = vpack.c.b16 %v205, %v204
    %v226 = vpack.c.b16 %v207, %v206
    %v227 = vpack.c.b16 %v209, %v208
    %v228 = vpack.c.b16 %v211, %v210
    %v229 = vpack.c.b16 %v213, %v212
    %246 = vmatprep.subr.bf16.mxu0 0
    %247 = vmatpush1.bf16.msra.mxu0 %v214
    %248 = vmatprep.subr.bf16.mxu0 0
    %249 = vmatpush1.bf16.msra.mxu0 %v215
    %250 = vmatprep.subr.bf16.mxu0 0
    %251 = vmatpush1.bf16.msra.mxu0 %v216
    %252 = vmatprep.subr.bf16.mxu0 0
    %253 = vmatpush1.bf16.msra.mxu0 %v217
    %254 = vmatprep.subr.bf16.mxu0 0
    %255 = vmatpush1.bf16.msra.mxu0 %v218
    %256 = vmatprep.subr.bf16.mxu0 0
    %257 = vmatpush1.bf16.msra.mxu0 %v219
    %258 = vmatprep.subr.bf16.mxu0 0
    %259 = vmatpush1.bf16.msra.mxu0 %v220
    %260 = vmatprep.subr.bf16.mxu0 0
    %261 = vmatpush1.bf16.msra.mxu0 %v221
    %262 = vmatprep.subr.bf16.mxu0 0
    %263 = vmatpush1.bf16.msra.mxu0 %v222
    %264 = vmatprep.subr.bf16.mxu0 0
    %265 = vmatpush1.bf16.msra.mxu0 %v223
    %266 = vmatprep.subr.bf16.mxu0 0
    %267 = vmatpush1.bf16.msra.mxu0 %v224
    %268 = vmatprep.subr.bf16.mxu0 0
    %269 = vmatpush1.bf16.msra.mxu0 %v225
    %270 = vmatprep.subr.bf16.mxu0 0
    %271 = vmatpush1.bf16.msra.mxu0 %v226
    %272 = vmatprep.subr.bf16.mxu0 0
    %273 = vmatpush1.bf16.msra.mxu0 %v227
    %274 = vmatprep.subr.bf16.mxu0 0
    %275 = vmatpush1.bf16.msra.mxu0 %v228
    %276 = vmatprep.subr.bf16.mxu0 0
    %277 = vmatpush1.bf16.msra.mxu0 %v229
    %278 = vmatprep.mubr.bf16.mxu0 %v117
    %279 = vmatmul.mubr.bf16.gmra.mrb[0].mxu0 %v116
    %v280 = vpop.f32.mrb[0].mxu0
    %v281 = vadd.f32 0.0, %v280
    %v282 = vpop.f32.mrb[0].mxu0
    %v283 = vpop.f32.mrb[0].mxu0
    %v284 = vpop.f32.mrb[0].mxu0
    %285 = vdwg.mxu0
    %v286 = vpack.c.bf16 %v281, %v281
    %287 = vst [vmem:[#allocation2] sm:$0xf] %v286
    %v288 = vld [vmem:[#allocation6] sm:$0xff]
    %v289 = vld [vmem:[#allocation8] sm:$0xff]
    %v290 = vpack.c.bf16 %v288, %v288
    %291 = vst [vmem:[#allocation2 + $0x4] sm:$0xf] %v290
    %v292 = vld [vmem:[#allocation2] sm:$0xff]
    %v293 = vld [vmem:[#allocation9] sm:$0xff]
    %v294 = vld [vmem:[#allocation9 + $0x8] sm:$0xff]
    %v295 = vld [vmem:[#allocation9 + $0x10] sm:$0xff]
    %v296 = vld [vmem:[#allocation9 + $0x18] sm:$0xff]
    %v297 = vld [vmem:[#allocation9 + $0x20] sm:$0xff]
    %v298 = vld [vmem:[#allocation9 + $0x28] sm:$0xff]
    %v299 = vld [vmem:[#allocation9 + $0x30] sm:$0xff]
    %v300 = vld [vmem:[#allocation9 + $0x38] sm:$0xff]
    %v301 = vld [vmem:[#allocation9 + $0x40] sm:$0xff]
    %v302 = vld [vmem:[#allocation9 + $0x48] sm:$0xff]
    %v303 = vld [vmem:[#allocation9 + $0x50] sm:$0xff]
    %v304 = vld [vmem:[#allocation9 + $0x58] sm:$0xff]
    %v305 = vld [vmem:[#allocation9 + $0x60] sm:$0xff]
    %v306 = vld [vmem:[#allocation9 + $0x68] sm:$0xff]
    %v307 = vld [vmem:[#allocation9 + $0x70] sm:$0xff]
    %v308 = vld [vmem:[#allocation9 + $0x78] sm:$0xff]
    %v309 = vld [vmem:[#allocation9 + $0x80] sm:$0xff]
    %v310 = vld [vmem:[#allocation9 + $0x88] sm:$0xff]
    %v311 = vld [vmem:[#allocation9 + $0x90] sm:$0xff]
    %v312 = vld [vmem:[#allocation9 + $0x98] sm:$0xff]
    %v313 = vld [vmem:[#allocation9 + $0xa0] sm:$0xff]
    %v314 = vld [vmem:[#allocation9 + $0xa8] sm:$0xff]
    %v315 = vld [vmem:[#allocation9 + $0xb0] sm:$0xff]
    %v316 = vld [vmem:[#allocation9 + $0xb8] sm:$0xff]
    %v317 = vld [vmem:[#allocation9 + $0xc0] sm:$0xff]
    %v318 = vld [vmem:[#allocation9 + $0xc8] sm:$0xff]
    %v319 = vld [vmem:[#allocation9 + $0xd0] sm:$0xff]
    %v320 = vld [vmem:[#allocation9 + $0xd8] sm:$0xff]
    %v321 = vld [vmem:[#allocation9 + $0xe0] sm:$0xff]
    %v322 = vld [vmem:[#allocation9 + $0xe8] sm:$0xff]
    %v323 = vld [vmem:[#allocation9 + $0xf0] sm:$0xff]
    %v324 = vld [vmem:[#allocation9 + $0xf8] sm:$0xff]
    %v325 = vld [vmem:[#allocation9 + $0x100] sm:$0xff]
    %v326 = vld [vmem:[#allocation9 + $0x108] sm:$0xff]
    %v327 = vld [vmem:[#allocation9 + $0x110] sm:$0xff]
    %v328 = vld [vmem:[#allocation9 + $0x118] sm:$0xff]
    %v329 = vld [vmem:[#allocation9 + $0x120] sm:$0xff]
    %v330 = vld [vmem:[#allocation9 + $0x128] sm:$0xff]
    %v331 = vld [vmem:[#allocation9 + $0x130] sm:$0xff]
    %v332 = vld [vmem:[#allocation9 + $0x138] sm:$0xff]
    %v333 = vld [vmem:[#allocation9 + $0x140] sm:$0xff]
    %v334 = vld [vmem:[#allocation9 + $0x148] sm:$0xff]
    %v335 = vld [vmem:[#allocation9 + $0x150] sm:$0xff]
    %v336 = vld [vmem:[#allocation9 + $0x158] sm:$0xff]
    %v337 = vld [vmem:[#allocation9 + $0x160] sm:$0xff]
    %v338 = vld [vmem:[#allocation9 + $0x168] sm:$0xff]
    %v339 = vld [vmem:[#allocation9 + $0x170] sm:$0xff]
    %v340 = vld [vmem:[#allocation9 + $0x178] sm:$0xff]
    %v341 = vld [vmem:[#allocation9 + $0x180] sm:$0xff]
    %v342 = vld [vmem:[#allocation9 + $0x188] sm:$0xff]
    %v343 = vld [vmem:[#allocation9 + $0x190] sm:$0xff]
    %v344 = vld [vmem:[#allocation9 + $0x198] sm:$0xff]
    %v345 = vld [vmem:[#allocation9 + $0x1a0] sm:$0xff]
    %v346 = vld [vmem:[#allocation9 + $0x1a8] sm:$0xff]
    %v347 = vld [vmem:[#allocation9 + $0x1b0] sm:$0xff]
    %v348 = vld [vmem:[#allocation9 + $0x1b8] sm:$0xff]
    %v349 = vld [vmem:[#allocation9 + $0x1c0] sm:$0xff]
    %v350 = vld [vmem:[#allocation9 + $0x1c8] sm:$0xff]
    %v351 = vld [vmem:[#allocation9 + $0x1d0] sm:$0xff]
    %v352 = vld [vmem:[#allocation9 + $0x1d8] sm:$0xff]
    %v353 = vld [vmem:[#allocation9 + $0x1e0] sm:$0xff]
    %v354 = vld [vmem:[#allocation9 + $0x1e8] sm:$0xff]
    %v355 = vld [vmem:[#allocation9 + $0x1f0] sm:$0xff]
    %v356 = vld [vmem:[#allocation9 + $0x1f8] sm:$0xff]
    %v357 = vld [vmem:[%s5] sm:$0xf]
    %v359 = vlaneseq
    %v360 = vshrl.u32 %v359, 7
    %v361 = vsub.s32 0, %v360
    %v362 = vrot.slane %v357, %v361
    %v363 = vlaneseq
    %v364 = vshrl.u32 %v363, 7
    %v365 = vsub.s32 1, %v364
    %v366 = vrot.slane %v357, %v365
    %v367 = vlaneseq
    %v368 = vshrl.u32 %v367, 7
    %v369 = vsub.s32 2, %v368
    %v370 = vrot.slane %v357, %v369
    %v371 = vlaneseq
    %v372 = vshrl.u32 %v371, 7
    %v373 = vsub.s32 3, %v372
    %v374 = vrot.slane %v357, %v373
    %v380 = vunpack.c.l.b16 %v292
    %v381 = vunpack.c.h.b16 %v292
    %v382 = vpack.c.b16 %v380, %v380
    %v383 = vpack.c.b16 %v381, %v381
    %v450 = vunpack.c.l.b16 %v293
    %v451 = vunpack.c.h.b16 %v293
    %v452 = vunpack.c.l.b16 %v294
    %v453 = vunpack.c.h.b16 %v294
    %v454 = vunpack.c.l.b16 %v295
    %v455 = vunpack.c.h.b16 %v295
    %v456 = vunpack.c.l.b16 %v296
    %v457 = vunpack.c.h.b16 %v296
    %v458 = vunpack.c.l.b16 %v297
    %v459 = vunpack.c.h.b16 %v297
    %v460 = vunpack.c.l.b16 %v298
    %v461 = vunpack.c.h.b16 %v298
    %v462 = vunpack.c.l.b16 %v299
    %v463 = vunpack.c.h.b16 %v299
    %v464 = vunpack.c.l.b16 %v300
    %v465 = vunpack.c.h.b16 %v300
    %v466 = vunpack.c.l.b16 %v301
    %v467 = vunpack.c.h.b16 %v301
    %v468 = vunpack.c.l.b16 %v302
    %v469 = vunpack.c.h.b16 %v302
    %v470 = vunpack.c.l.b16 %v303
    %v471 = vunpack.c.h.b16 %v303
    %v472 = vunpack.c.l.b16 %v304
    %v473 = vunpack.c.h.b16 %v304
    %v474 = vunpack.c.l.b16 %v305
    %v475 = vunpack.c.h.b16 %v305
    %v476 = vunpack.c.l.b16 %v306
    %v477 = vunpack.c.h.b16 %v306
    %v478 = vunpack.c.l.b16 %v307
    %v479 = vunpack.c.h.b16 %v307
    %v480 = vunpack.c.l.b16 %v308
    %v481 = vunpack.c.h.b16 %v308
    %v482 = vunpack.c.l.b16 %v309
    %v483 = vunpack.c.h.b16 %v309
    %v484 = vunpack.c.l.b16 %v310
    %v485 = vunpack.c.h.b16 %v310
    %v486 = vunpack.c.l.b16 %v311
    %v487 = vunpack.c.h.b16 %v311
    %v488 = vunpack.c.l.b16 %v312
    %v489 = vunpack.c.h.b16 %v312
    %v490 = vunpack.c.l.b16 %v313
    %v491 = vunpack.c.h.b16 %v313
    %v492 = vunpack.c.l.b16 %v314
    %v493 = vunpack.c.h.b16 %v314
    %v494 = vunpack.c.l.b16 %v315
    %v495 = vunpack.c.h.b16 %v315
    %v496 = vunpack.c.l.b16 %v316
    %v497 = vunpack.c.h.b16 %v316
    %v498 = vunpack.c.l.b16 %v317
    %v499 = vunpack.c.h.b16 %v317
    %v500 = vunpack.c.l.b16 %v318
    %v501 = vunpack.c.h.b16 %v318
    %v502 = vunpack.c.l.b16 %v319
    %v503 = vunpack.c.h.b16 %v319
    %v504 = vunpack.c.l.b16 %v320
    %v505 = vunpack.c.h.b16 %v320
    %v506 = vunpack.c.l.b16 %v321
    %v507 = vunpack.c.h.b16 %v321
    %v508 = vunpack.c.l.b16 %v322
    %v509 = vunpack.c.h.b16 %v322
    %v510 = vunpack.c.l.b16 %v323
    %v511 = vunpack.c.h.b16 %v323
    %v512 = vunpack.c.l.b16 %v324
    %v513 = vunpack.c.h.b16 %v324
    %v514 = vunpack.c.l.b16 %v325
    %v515 = vunpack.c.h.b16 %v325
    %v516 = vunpack.c.l.b16 %v326
    %v517 = vunpack.c.h.b16 %v326
    %v518 = vunpack.c.l.b16 %v327
    %v519 = vunpack.c.h.b16 %v327
    %v520 = vunpack.c.l.b16 %v328
    %v521 = vunpack.c.h.b16 %v328
    %v522 = vunpack.c.l.b16 %v329
    %v523 = vunpack.c.h.b16 %v329
    %v524 = vunpack.c.l.b16 %v330
    %v525 = vunpack.c.h.b16 %v330
    %v526 = vunpack.c.l.b16 %v331
    %v527 = vunpack.c.h.b16 %v331
    %v528 = vunpack.c.l.b16 %v332
    %v529 = vunpack.c.h.b16 %v332
    %v530 = vunpack.c.l.b16 %v333
    %v531 = vunpack.c.h.b16 %v333
    %v532 = vunpack.c.l.b16 %v334
    %v533 = vunpack.c.h.b16 %v334
    %v534 = vunpack.c.l.b16 %v335
    %v535 = vunpack.c.h.b16 %v335
    %v536 = vunpack.c.l.b16 %v336
    %v537 = vunpack.c.h.b16 %v336
    %v538 = vunpack.c.l.b16 %v337
    %v539 = vunpack.c.h.b16 %v337
    %v540 = vunpack.c.l.b16 %v338
    %v541 = vunpack.c.h.b16 %v338
    %v542 = vunpack.c.l.b16 %v339
    %v543 = vunpack.c.h.b16 %v339
    %v544 = vunpack.c.l.b16 %v340
    %v545 = vunpack.c.h.b16 %v340
    %v546 = vunpack.c.l.b16 %v341
    %v547 = vunpack.c.h.b16 %v341
    %v548 = vunpack.c.l.b16 %v342
    %v549 = vunpack.c.h.b16 %v342
    %v550 = vunpack.c.l.b16 %v343
    %v551 = vunpack.c.h.b16 %v343
    %v552 = vunpack.c.l.b16 %v344
    %v553 = vunpack.c.h.b16 %v344
    %v554 = vunpack.c.l.b16 %v345
    %v555 = vunpack.c.h.b16 %v345
    %v556 = vunpack.c.l.b16 %v346
    %v557 = vunpack.c.h.b16 %v346
    %v558 = vunpack.c.l.b16 %v347
    %v559 = vunpack.c.h.b16 %v347
    %v560 = vunpack.c.l.b16 %v348
    %v561 = vunpack.c.h.b16 %v348
    %v562 = vunpack.c.l.b16 %v349
    %v563 = vunpack.c.h.b16 %v349
    %v564 = vunpack.c.l.b16 %v350
    %v565 = vunpack.c.h.b16 %v350
    %v566 = vunpack.c.l.b16 %v351
    %v567 = vunpack.c.h.b16 %v351
    %v568 = vunpack.c.l.b16 %v352
    %v569 = vunpack.c.h.b16 %v352
    %v570 = vunpack.c.l.b16 %v353
    %v571 = vunpack.c.h.b16 %v353
    %v572 = vunpack.c.l.b16 %v354
    %v573 = vunpack.c.h.b16 %v354
    %v574 = vunpack.c.l.b16 %v355
    %v575 = vunpack.c.h.b16 %v355
    %v576 = vunpack.c.l.b16 %v356
    %v577 = vunpack.c.h.b16 %v356
    %v578 = vpack.c.b16 %v454, %v450
    %v579 = vpack.c.b16 %v455, %v451
    %v580 = vpack.c.b16 %v456, %v452
    %v581 = vpack.c.b16 %v457, %v453
    %v582 = vpack.c.b16 %v462, %v458
    %v583 = vpack.c.b16 %v463, %v459
    %v584 = vpack.c.b16 %v464, %v460
    %v585 = vpack.c.b16 %v465, %v461
    %v586 = vpack.c.b16 %v470, %v466
    %v587 = vpack.c.b16 %v471, %v467
    %v588 = vpack.c.b16 %v472, %v468
    %v589 = vpack.c.b16 %v473, %v469
    %v590 = vpack.c.b16 %v478, %v474
    %v591 = vpack.c.b16 %v479, %v475
    %v592 = vpack.c.b16 %v480, %v476
    %v593 = vpack.c.b16 %v481, %v477
    %v594 = vpack.c.b16 %v486, %v482
    %v595 = vpack.c.b16 %v487, %v483
    %v596 = vpack.c.b16 %v488, %v484
    %v597 = vpack.c.b16 %v489, %v485
    %v598 = vpack.c.b16 %v494, %v490
    %v599 = vpack.c.b16 %v495, %v491
    %v600 = vpack.c.b16 %v496, %v492
    %v601 = vpack.c.b16 %v497, %v493
    %v602 = vpack.c.b16 %v502, %v498
    %v603 = vpack.c.b16 %v503, %v499
    %v604 = vpack.c.b16 %v504, %v500
    %v605 = vpack.c.b16 %v505, %v501
    %v606 = vpack.c.b16 %v510, %v506
    %v607 = vpack.c.b16 %v511, %v507
    %v608 = vpack.c.b16 %v512, %v508
    %v609 = vpack.c.b16 %v513, %v509
    %v610 = vpack.c.b16 %v518, %v514
    %v611 = vpack.c.b16 %v519, %v515
    %v612 = vpack.c.b16 %v520, %v516
    %v613 = vpack.c.b16 %v521, %v517
    %v614 = vpack.c.b16 %v526, %v522
    %v615 = vpack.c.b16 %v527, %v523
    %v616 = vpack.c.b16 %v528, %v524
    %v617 = vpack.c.b16 %v529, %v525
    %v618 = vpack.c.b16 %v534, %v530
    %v619 = vpack.c.b16 %v535, %v531
    %v620 = vpack.c.b16 %v536, %v532
    %v621 = vpack.c.b16 %v537, %v533
    %v622 = vpack.c.b16 %v542, %v538
    %v623 = vpack.c.b16 %v543, %v539
    %v624 = vpack.c.b16 %v544, %v540
    %v625 = vpack.c.b16 %v545, %v541
    %v626 = vpack.c.b16 %v550, %v546
    %v627 = vpack.c.b16 %v551, %v547
    %v628 = vpack.c.b16 %v552, %v548
    %v629 = vpack.c.b16 %v553, %v549
    %v630 = vpack.c.b16 %v558, %v554
    %v631 = vpack.c.b16 %v559, %v555
    %v632 = vpack.c.b16 %v560, %v556
    %v633 = vpack.c.b16 %v561, %v557
    %v634 = vpack.c.b16 %v566, %v562
    %v635 = vpack.c.b16 %v567, %v563
    %v636 = vpack.c.b16 %v568, %v564
    %v637 = vpack.c.b16 %v569, %v565
    %v638 = vpack.c.b16 %v574, %v570
    %v639 = vpack.c.b16 %v575, %v571
    %v640 = vpack.c.b16 %v576, %v572
    %v641 = vpack.c.b16 %v577, %v573
    %706 = vmatprep.subr.bf16.mxu0 %v579
    %707 = vmatpush1.bf16.msra.mxu0 %v578
    %708 = vmatprep.subr.bf16.mxu0 %v583
    %709 = vmatpush1.bf16.msra.mxu0 %v582
    %710 = vmatprep.subr.bf16.mxu0 %v587
    %711 = vmatpush1.bf16.msra.mxu0 %v586
    %712 = vmatprep.subr.bf16.mxu0 %v591
    %713 = vmatpush1.bf16.msra.mxu0 %v590
    %714 = vmatprep.subr.bf16.mxu0 %v595
    %715 = vmatpush1.bf16.msra.mxu0 %v594
    %716 = vmatprep.subr.bf16.mxu0 %v599
    %717 = vmatpush1.bf16.msra.mxu0 %v598
    %718 = vmatprep.subr.bf16.mxu0 %v603
    %719 = vmatpush1.bf16.msra.mxu0 %v602
    %720 = vmatprep.subr.bf16.mxu0 %v607
    %721 = vmatpush1.bf16.msra.mxu0 %v606
    %722 = vmatprep.subr.bf16.mxu0 %v611
    %723 = vmatpush1.bf16.msra.mxu0 %v610
    %724 = vmatprep.subr.bf16.mxu0 %v615
    %725 = vmatpush1.bf16.msra.mxu0 %v614
    %726 = vmatprep.subr.bf16.mxu0 %v619
    %727 = vmatpush1.bf16.msra.mxu0 %v618
    %728 = vmatprep.subr.bf16.mxu0 %v623
    %729 = vmatpush1.bf16.msra.mxu0 %v622
    %730 = vmatprep.subr.bf16.mxu0 %v627
    %731 = vmatpush1.bf16.msra.mxu0 %v626
    %732 = vmatprep.subr.bf16.mxu0 %v631
    %733 = vmatpush1.bf16.msra.mxu0 %v630
    %734 = vmatprep.subr.bf16.mxu0 %v635
    %735 = vmatpush1.bf16.msra.mxu0 %v634
    %736 = vmatprep.subr.bf16.mxu0 %v639
    %737 = vmatpush1.bf16.msra.mxu0 %v638
    %738 = vmatprep.mubr.bf16.mxu0 %v383
    %739 = vmatmul.mubr.bf16.gmra.mrb[0].mxu0 %v382
    %v740 = vpop.f32.mrb[0].mxu0
    %v741 = vadd.f32 %v362, %v740
    %v742 = vpop.f32.mrb[0].mxu0
    %v743 = vadd.f32 %v366, %v742
    %v744 = vpop.f32.mrb[0].mxu0
    %v745 = vpop.f32.mrb[0].mxu0
    %746 = vdwg.mxu0
    %747 = vmatprep.subr.bf16.mxu0 %v581
    %748 = vmatpush1.bf16.msra.mxu0 %v580
    %749 = vmatprep.subr.bf16.mxu0 %v585
    %750 = vmatpush1.bf16.msra.mxu0 %v584
    %751 = vmatprep.subr.bf16.mxu0 %v589
    %752 = vmatpush1.bf16.msra.mxu0 %v588
    %753 = vmatprep.subr.bf16.mxu0 %v593
    %754 = vmatpush1.bf16.msra.mxu0 %v592
    %755 = vmatprep.subr.bf16.mxu0 %v597
    %756 = vmatpush1.bf16.msra.mxu0 %v596
    %757 = vmatprep.subr.bf16.mxu0 %v601
    %758 = vmatpush1.bf16.msra.mxu0 %v600
    %759 = vmatprep.subr.bf16.mxu0 %v605
    %760 = vmatpush1.bf16.msra.mxu0 %v604
    %761 = vmatprep.subr.bf16.mxu0 %v609
    %762 = vmatpush1.bf16.msra.mxu0 %v608
    %763 = vmatprep.subr.bf16.mxu0 %v613
    %764 = vmatpush1.bf16.msra.mxu0 %v612
    %765 = vmatprep.subr.bf16.mxu0 %v617
    %766 = vmatpush1.bf16.msra.mxu0 %v616
    %767 = vmatprep.subr.bf16.mxu0 %v621
    %768 = vmatpush1.bf16.msra.mxu0 %v620
    %769 = vmatprep.subr.bf16.mxu0 %v625
    %770 = vmatpush1.bf16.msra.mxu0 %v624
    %771 = vmatprep.subr.bf16.mxu0 %v629
    %772 = vmatpush1.bf16.msra.mxu0 %v628
    %773 = vmatprep.subr.bf16.mxu0 %v633
    %774 = vmatpush1.bf16.msra.mxu0 %v632
    %775 = vmatprep.subr.bf16.mxu0 %v637
    %776 = vmatpush1.bf16.msra.mxu0 %v636
    %777 = vmatprep.subr.bf16.mxu0 %v641
    %778 = vmatpush1.bf16.msra.mxu0 %v640
    %779 = vmatprep.mubr.bf16.mxu0 %v383
    %780 = vmatmul.mubr.bf16.gmra.mrb[0].mxu0 %v382
    %v781 = vpop.f32.mrb[0].mxu0
    %v782 = vadd.f32 %v370, %v781
    %v783 = vpop.f32.mrb[0].mxu0
    %v784 = vadd.f32 %v374, %v783
    %v785 = vpop.f32.mrb[0].mxu0
    %v786 = vpop.f32.mrb[0].mxu0
    %787 = vdwg.mxu0
    %v788 = vxor.u32 %v741, 2147483648
    %v789 = vmul.f32 %v788, 1.442695
    %v790 = vpow.pop %v789
    %v791 = vadd.f32 %v790, 1.0
    %v792 = vrcp.pop %v791
    %v793 = vmul.f32 1.0, %v792
    %v794 = vxor.u32 %v743, 2147483648
    %v795 = vmul.f32 %v794, 1.442695
    %v796 = vpow.pop %v795
    %v797 = vadd.f32 %v796, 1.0
    %v798 = vrcp.pop %v797
    %v799 = vmul.f32 1.0, %v798
    %v800 = vtanh.pop %v782
    %v801 = vxor.u32 %v784, 2147483648
    %v802 = vmul.f32 %v801, 1.442695
    %v803 = vpow.pop %v802
    %v804 = vadd.f32 %v803, 1.0
    %v805 = vrcp.pop %v804
    %v806 = vmul.f32 1.0, %v805
    %v807 = vmul.f32 %v799, %v289
    %v808 = vmul.f32 %v793, %v800
    %v809 = vadd.f32 %v807, %v808
    %v810 = vtanh.pop %v809
    %v811 = vmul.f32 %v806, %v810
    %812 = vst [vmem:[#allocation13] sm:$0xff] %v811
    %813 = vst [vmem:[#allocation15] sm:$0xff] %v809
    %v814 = vpack.c.bf16 %v811, %v811
    %815 = vst [vmem:[#allocation2] sm:$0xf] %v814
    %s816 = scalar_lea.vmem [#allocation6], 8
    %v817 = vld [vmem:[%s816] sm:$0xff]
    %s818 = scalar_lea.vmem [#allocation8], 8
    %v819 = vld [vmem:[%s818] sm:$0xff]
    %v820 = vpack.c.bf16 %v817, %v817
    %821 = vst [vmem:[#allocation2 + $0x4] sm:$0xf] %v820
    %v822 = vld [vmem:[#allocation2] sm:$0xff]
    %s823 = scalar_lea.vmem [#allocation9], 512
    %v824 = vld [vmem:[%s823] sm:$0xff]
    %v825 = vld [vmem:[%s823 + $0x8] sm:$0xff]
    %v826 = vld [vmem:[%s823 + $0x10] sm:$0xff]
    %v827 = vld [vmem:[%s823 + $0x18] sm:$0xff]
    %v828 = vld [vmem:[%s823 + $0x20] sm:$0xff]
    %v829 = vld [vmem:[%s823 + $0x28] sm:$0xff]
    %v830 = vld [vmem:[%s823 + $0x30] sm:$0xff]
    %v831 = vld [vmem:[%s823 + $0x38] sm:$0xff]
    %v832 = vld [vmem:[%s823 + $0x40] sm:$0xff]
    %v833 = vld [vmem:[%s823 + $0x48] sm:$0xff]
    %v834 = vld [vmem:[%s823 + $0x50] sm:$0xff]
    %v835 = vld [vmem:[%s823 + $0x58] sm:$0xff]
    %v836 = vld [vmem:[%s823 + $0x60] sm:$0xff]
    %v837 = vld [vmem:[%s823 + $0x68] sm:$0xff]
    %v838 = vld [vmem:[%s823 + $0x70] sm:$0xff]
    %v839 = vld [vmem:[%s823 + $0x78] sm:$0xff]
    %v840 = vld [vmem:[%s823 + $0x80] sm:$0xff]
    %v841 = vld [vmem:[%s823 + $0x88] sm:$0xff]
    %v842 = vld [vmem:[%s823 + $0x90] sm:$0xff]
    %v843 = vld [vmem:[%s823 + $0x98] sm:$0xff]
    %v844 = vld [vmem:[%s823 + $0xa0] sm:$0xff]
    %v845 = vld [vmem:[%s823 + $0xa8] sm:$0xff]
    %v846 = vld [vmem:[%s823 + $0xb0] sm:$0xff]
    %v847 = vld [vmem:[%s823 + $0xb8] sm:$0xff]
    %v848 = vld [vmem:[%s823 + $0xc0] sm:$0xff]
    %v849 = vld [vmem:[%s823 + $0xc8] sm:$0xff]
    %v850 = vld [vmem:[%s823 + $0xd0] sm:$0xff]
    %v851 = vld [vmem:[%s823 + $0xd8] sm:$0xff]
    %v852 = vld [vmem:[%s823 + $0xe0] sm:$0xff]
    %v853 = vld [vmem:[%s823 + $0xe8] sm:$0xff]
    %v854 = vld [vmem:[%s823 + $0xf0] sm:$0xff]
    %v855 = vld [vmem:[%s823 + $0xf8] sm:$0xff]
    %v856 = vld [vmem:[%s823 + $0x100] sm:$0xff]
    %v857 = vld [vmem:[%s823 + $0x108] sm:$0xff]
    %v858 = vld [vmem:[%s823 + $0x110] sm:$0xff]
    %v859 = vld [vmem:[%s823 + $0x118] sm:$0xff]
    %v860 = vld [vmem:[%s823 + $0x120] sm:$0xff]
    %v861 = vld [vmem:[%s823 + $0x128] sm:$0xff]
    %v862 = vld [vmem:[%s823 + $0x130] sm:$0xff]
    %v863 = vld [vmem:[%s823 + $0x138] sm:$0xff]
    %v864 = vld [vmem:[%s823 + $0x140] sm:$0xff]
    %v865 = vld [vmem:[%s823 + $0x148] sm:$0xff]
    %v866 = vld [vmem:[%s823 + $0x150] sm:$0xff]
    %v867 = vld [vmem:[%s823 + $0x158] sm:$0xff]
    %v868 = vld [vmem:[%s823 + $0x160] sm:$0xff]
    %v869 = vld [vmem:[%s823 + $0x168] sm:$0xff]
    %v870 = vld [vmem:[%s823 + $0x170] sm:$0xff]
    %v871 = vld [vmem:[%s823 + $0x178] sm:$0xff]
    %v872 = vld [vmem:[%s823 + $0x180] sm:$0xff]
    %v873 = vld [vmem:[%s823 + $0x188] sm:$0xff]
    %v874 = vld [vmem:[%s823 + $0x190] sm:$0xff]
    %v875 = vld [vmem:[%s823 + $0x198] sm:$0xff]
    %v876 = vld [vmem:[%s823 + $0x1a0] sm:$0xff]
    %v877 = vld [vmem:[%s823 + $0x1a8] sm:$0xff]
    %v878 = vld [vmem:[%s823 + $0x1b0] sm:$0xff]
    %v879 = vld [vmem:[%s823 + $0x1b8] sm:$0xff]
    %v880 = vld [vmem:[%s823 + $0x1c0] sm:$0xff]
    %v881 = vld [vmem:[%s823 + $0x1c8] sm:$0xff]
    %v882 = vld [vmem:[%s823 + $0x1d0] sm:$0xff]
    %v883 = vld [vmem:[%s823 + $0x1d8] sm:$0xff]
    %v884 = vld [vmem:[%s823 + $0x1e0] sm:$0xff]
    %v885 = vld [vmem:[%s823 + $0x1e8] sm:$0xff]
    %v886 = vld [vmem:[%s823 + $0x1f0] sm:$0xff]
    %v887 = vld [vmem:[%s823 + $0x1f8] sm:$0xff]
    %s888 = scalar_lea.vmem %s5, 4
    %v889 = vld [vmem:[%s888] sm:$0xf]
    %v891 = vlaneseq
    %v892 = vshrl.u32 %v891, 7
    %v893 = vsub.s32 0, %v892
    %v894 = vrot.slane %v889, %v893
    %v895 = vlaneseq
    %v896 = vshrl.u32 %v895, 7
    %v897 = vsub.s32 1, %v896
    %v898 = vrot.slane %v889, %v897
    %v899 = vlaneseq
    %v900 = vshrl.u32 %v899, 7
    %v901 = vsub.s32 2, %v900
    %v902 = vrot.slane %v889, %v901
    %v903 = vlaneseq
    %v904 = vshrl.u32 %v903, 7
    %v905 = vsub.s32 3, %v904
    %v906 = vrot.slane %v889, %v905
    %v912 = vunpack.c.l.b16 %v822
    %v913 = vunpack.c.h.b16 %v822
    %v914 = vpack.c.b16 %v912, %v912
    %v915 = vpack.c.b16 %v913, %v913
    %v982 = vunpack.c.l.b16 %v824
    %v983 = vunpack.c.h.b16 %v824
    %v984 = vunpack.c.l.b16 %v825
    %v985 = vunpack.c.h.b16 %v825
    %v986 = vunpack.c.l.b16 %v826
    %v987 = vunpack.c.h.b16 %v826
    %v988 = vunpack.c.l.b16 %v827
    %v989 = vunpack.c.h.b16 %v827
    %v990 = vunpack.c.l.b16 %v828
    %v991 = vunpack.c.h.b16 %v828
    %v992 = vunpack.c.l.b16 %v829
    %v993 = vunpack.c.h.b16 %v829
    %v994 = vunpack.c.l.b16 %v830
    %v995 = vunpack.c.h.b16 %v830
    %v996 = vunpack.c.l.b16 %v831
    %v997 = vunpack.c.h.b16 %v831
    %v998 = vunpack.c.l.b16 %v832
    %v999 = vunpack.c.h.b16 %v832
    %v1000 = vunpack.c.l.b16 %v833
    %v1001 = vunpack.c.h.b16 %v833
    %v1002 = vunpack.c.l.b16 %v834
    %v1003 = vunpack.c.h.b16 %v834
    %v1004 = vunpack.c.l.b16 %v835
    %v1005 = vunpack.c.h.b16 %v835
    %v1006 = vunpack.c.l.b16 %v836
    %v1007 = vunpack.c.h.b16 %v836
    %v1008 = vunpack.c.l.b16 %v837
    %v1009 = vunpack.c.h.b16 %v837
    %v1010 = vunpack.c.l.b16 %v838
    %v1011 = vunpack.c.h.b16 %v838
    %v1012 = vunpack.c.l.b16 %v839
    %v1013 = vunpack.c.h.b16 %v839
    %v1014 = vunpack.c.l.b16 %v840
    %v1015 = vunpack.c.h.b16 %v840
    %v1016 = vunpack.c.l.b16 %v841
    %v1017 = vunpack.c.h.b16 %v841
    %v1018 = vunpack.c.l.b16 %v842
    %v1019 = vunpack.c.h.b16 %v842
    %v1020 = vunpack.c.l.b16 %v843
    %v1021 = vunpack.c.h.b16 %v843
    %v1022 = vunpack.c.l.b16 %v844
    %v1023 = vunpack.c.h.b16 %v844
    %v1024 = vunpack.c.l.b16 %v845
    %v1025 = vunpack.c.h.b16 %v845
    %v1026 = vunpack.c.l.b16 %v846
    %v1027 = vunpack.c.h.b16 %v846
    %v1028 = vunpack.c.l.b16 %v847
    %v1029 = vunpack.c.h.b16 %v847
    %v1030 = vunpack.c.l.b16 %v848
    %v1031 = vunpack.c.h.b16 %v848
    %v1032 = vunpack.c.l.b16 %v849
    %v1033 = vunpack.c.h.b16 %v849
    %v1034 = vunpack.c.l.b16 %v850
    %v1035 = vunpack.c.h.b16 %v850
    %v1036 = vunpack.c.l.b16 %v851
    %v1037 = vunpack.c.h.b16 %v851
    %v1038 = vunpack.c.l.b16 %v852
    %v1039 = vunpack.c.h.b16 %v852
    %v1040 = vunpack.c.l.b16 %v853
    %v1041 = vunpack.c.h.b16 %v853
    %v1042 = vunpack.c.l.b16 %v854
    %v1043 = vunpack.c.h.b16 %v854
    %v1044 = vunpack.c.l.b16 %v855
    %v1045 = vunpack.c.h.b16 %v855
    %v1046 = vunpack.c.l.b16 %v856
    %v1047 = vunpack.c.h.b16 %v856
    %v1048 = vunpack.c.l.b16 %v857
    %v1049 = vunpack.c.h.b16 %v857
    %v1050 = vunpack.c.l.b16 %v858
    %v1051 = vunpack.c.h.b16 %v858
    %v1052 = vunpack.c.l.b16 %v859
    %v1053 = vunpack.c.h.b16 %v859
    %v1054 = vunpack.c.l.b16 %v860
    %v1055 = vunpack.c.h.b16 %v860
    %v1056 = vunpack.c.l.b16 %v861
    %v1057 = vunpack.c.h.b16 %v861
    %v1058 = vunpack.c.l.b16 %v862
    %v1059 = vunpack.c.h.b16 %v862
    %v1060 = vunpack.c.l.b16 %v863
    %v1061 = vunpack.c.h.b16 %v863
    %v1062 = vunpack.c.l.b16 %v864
    %v1063 = vunpack.c.h.b16 %v864
    %v1064 = vunpack.c.l.b16 %v865
    %v1065 = vunpack.c.h.b16 %v865
    %v1066 = vunpack.c.l.b16 %v866
    %v1067 = vunpack.c.h.b16 %v866
    %v1068 = vunpack.c.l.b16 %v867
    %v1069 = vunpack.c.h.b16 %v867
    %v1070 = vunpack.c.l.b16 %v868
    %v1071 = vunpack.c.h.b16 %v868
    %v1072 = vunpack.c.l.b16 %v869
    %v1073 = vunpack.c.h.b16 %v869
    %v1074 = vunpack.c.l.b16 %v870
    %v1075 = vunpack.c.h.b16 %v870
    %v1076 = vunpack.c.l.b16 %v871
    %v1077 = vunpack.c.h.b16 %v871
    %v1078 = vunpack.c.l.b16 %v872
    %v1079 = vunpack.c.h.b16 %v872
    %v1080 = vunpack.c.l.b16 %v873
    %v1081 = vunpack.c.h.b16 %v873
    %v1082 = vunpack.c.l.b16 %v874
    %v1083 = vunpack.c.h.b16 %v874
    %v1084 = vunpack.c.l.b16 %v875
    %v1085 = vunpack.c.h.b16 %v875
    %v1086 = vunpack.c.l.b16 %v876
    %v1087 = vunpack.c.h.b16 %v876
    %v1088 = vunpack.c.l.b16 %v877
    %v1089 = vunpack.c.h.b16 %v877
    %v1090 = vunpack.c.l.b16 %v878
    %v1091 = vunpack.c.h.b16 %v878
    %v1092 = vunpack.c.l.b16 %v879
    %v1093 = vunpack.c.h.b16 %v879
    %v1094 = vunpack.c.l.b16 %v880
    %v1095 = vunpack.c.h.b16 %v880
    %v1096 = vunpack.c.l.b16 %v881
    %v1097 = vunpack.c.h.b16 %v881
    %v1098 = vunpack.c.l.b16 %v882
    %v1099 = vunpack.c.h.b16 %v882
    %v1100 = vunpack.c.l.b16 %v883
    %v1101 = vunpack.c.h.b16 %v883
    %v1102 = vunpack.c.l.b16 %v884
    %v1103 = vunpack.c.h.b16 %v884
    %v1104 = vunpack.c.l.b16 %v885
    %v1105 = vunpack.c.h.b16 %v885
    %v1106 = vunpack.c.l.b16 %v886
    %v1107 = vunpack.c.h.b16 %v886
    %v1108 = vunpack.c.l.b16 %v887
    %v1109 = vunpack.c.h.b16 %v887
    %v1110 = vpack.c.b16 %v986, %v982
    %v1111 = vpack.c.b16 %v987, %v983
    %v1112 = vpack.c.b16 %v988, %v984
    %v1113 = vpack.c.b16 %v989, %v985
    %v1114 = vpack.c.b16 %v994, %v990
    %v1115 = vpack.c.b16 %v995, %v991
    %v1116 = vpack.c.b16 %v996, %v992
    %v1117 = vpack.c.b16 %v997, %v993
    %v1118 = vpack.c.b16 %v1002, %v998
    %v1119 = vpack.c.b16 %v1003, %v999
    %v1120 = vpack.c.b16 %v1004, %v1000
    %v1121 = vpack.c.b16 %v1005, %v1001
    %v1122 = vpack.c.b16 %v1010, %v1006
    %v1123 = vpack.c.b16 %v1011, %v1007
    %v1124 = vpack.c.b16 %v1012, %v1008
    %v1125 = vpack.c.b16 %v1013, %v1009
    %v1126 = vpack.c.b16 %v1018, %v1014
    %v1127 = vpack.c.b16 %v1019, %v1015
    %v1128 = vpack.c.b16 %v1020, %v1016
    %v1129 = vpack.c.b16 %v1021, %v1017
    %v1130 = vpack.c.b16 %v1026, %v1022
    %v1131 = vpack.c.b16 %v1027, %v1023
    %v1132 = vpack.c.b16 %v1028, %v1024
    %v1133 = vpack.c.b16 %v1029, %v1025
    %v1134 = vpack.c.b16 %v1034, %v1030
    %v1135 = vpack.c.b16 %v1035, %v1031
    %v1136 = vpack.c.b16 %v1036, %v1032
    %v1137 = vpack.c.b16 %v1037, %v1033
    %v1138 = vpack.c.b16 %v1042, %v1038
    %v1139 = vpack.c.b16 %v1043, %v1039
    %v1140 = vpack.c.b16 %v1044, %v1040
    %v1141 = vpack.c.b16 %v1045, %v1041
    %v1142 = vpack.c.b16 %v1050, %v1046
    %v1143 = vpack.c.b16 %v1051, %v1047
    %v1144 = vpack.c.b16 %v1052, %v1048
    %v1145 = vpack.c.b16 %v1053, %v1049
    %v1146 = vpack.c.b16 %v1058, %v1054
    %v1147 = vpack.c.b16 %v1059, %v1055
    %v1148 = vpack.c.b16 %v1060, %v1056
    %v1149 = vpack.c.b16 %v1061, %v1057
    %v1150 = vpack.c.b16 %v1066, %v1062
    %v1151 = vpack.c.b16 %v1067, %v1063
    %v1152 = vpack.c.b16 %v1068, %v1064
    %v1153 = vpack.c.b16 %v1069, %v1065
    %v1154 = vpack.c.b16 %v1074, %v1070
    %v1155 = vpack.c.b16 %v1075, %v1071
    %v1156 = vpack.c.b16 %v1076, %v1072
    %v1157 = vpack.c.b16 %v1077, %v1073
    %v1158 = vpack.c.b16 %v1082, %v1078
    %v1159 = vpack.c.b16 %v1083, %v1079
    %v1160 = vpack.c.b16 %v1084, %v1080
    %v1161 = vpack.c.b16 %v1085, %v1081
    %v1162 = vpack.c.b16 %v1090, %v1086
    %v1163 = vpack.c.b16 %v1091, %v1087
    %v1164 = vpack.c.b16 %v1092, %v1088
    %v1165 = vpack.c.b16 %v1093, %v1089
    %v1166 = vpack.c.b16 %v1098, %v1094
    %v1167 = vpack.c.b16 %v1099, %v1095
    %v1168 = vpack.c.b16 %v1100, %v1096
    %v1169 = vpack.c.b16 %v1101, %v1097
    %v1170 = vpack.c.b16 %v1106, %v1102
    %v1171 = vpack.c.b16 %v1107, %v1103
    %v1172 = vpack.c.b16 %v1108, %v1104
    %v1173 = vpack.c.b16 %v1109, %v1105
    %1238 = vmatprep.subr.bf16.mxu0 %v1111
    %1239 = vmatpush1.bf16.msra.mxu0 %v1110
    %1240 = vmatprep.subr.bf16.mxu0 %v1115
    %1241 = vmatpush1.bf16.msra.mxu0 %v1114
    %1242 = vmatprep.subr.bf16.mxu0 %v1119
    %1243 = vmatpush1.bf16.msra.mxu0 %v1118
    %1244 = vmatprep.subr.bf16.mxu0 %v1123
    %1245 = vmatpush1.bf16.msra.mxu0 %v1122
    %1246 = vmatprep.subr.bf16.mxu0 %v1127
    %1247 = vmatpush1.bf16.msra.mxu0 %v1126
    %1248 = vmatprep.subr.bf16.mxu0 %v1131
    %1249 = vmatpush1.bf16.msra.mxu0 %v1130
    %1250 = vmatprep.subr.bf16.mxu0 %v1135
    %1251 = vmatpush1.bf16.msra.mxu0 %v1134
    %1252 = vmatprep.subr.bf16.mxu0 %v1139
    %1253 = vmatpush1.bf16.msra.mxu0 %v1138
    %1254 = vmatprep.subr.bf16.mxu0 %v1143
    %1255 = vmatpush1.bf16.msra.mxu0 %v1142
    %1256 = vmatprep.subr.bf16.mxu0 %v1147
    %1257 = vmatpush1.bf16.msra.mxu0 %v1146
    %1258 = vmatprep.subr.bf16.mxu0 %v1151
    %1259 = vmatpush1.bf16.msra.mxu0 %v1150
    %1260 = vmatprep.subr.bf16.mxu0 %v1155
    %1261 = vmatpush1.bf16.msra.mxu0 %v1154
    %1262 = vmatprep.subr.bf16.mxu0 %v1159
    %1263 = vmatpush1.bf16.msra.mxu0 %v1158
    %1264 = vmatprep.subr.bf16.mxu0 %v1163
    %1265 = vmatpush1.bf16.msra.mxu0 %v1162
    %1266 = vmatprep.subr.bf16.mxu0 %v1167
    %1267 = vmatpush1.bf16.msra.mxu0 %v1166
    %1268 = vmatprep.subr.bf16.mxu0 %v1171
    %1269 = vmatpush1.bf16.msra.mxu0 %v1170
    %1270 = vmatprep.mubr.bf16.mxu0 %v915
    %1271 = vmatmul.mubr.bf16.gmra.mrb[0].mxu0 %v914
    %v1272 = vpop.f32.mrb[0].mxu0
    %v1273 = vadd.f32 %v894, %v1272
    %v1274 = vpop.f32.mrb[0].mxu0
    %v1275 = vadd.f32 %v898, %v1274
    %v1276 = vpop.f32.mrb[0].mxu0
    %v1277 = vpop.f32.mrb[0].mxu0
    %1278 = vdwg.mxu0
    %1279 = vmatprep.subr.bf16.mxu0 %v1113
    %1280 = vmatpush1.bf16.msra.mxu0 %v1112
    %1281 = vmatprep.subr.bf16.mxu0 %v1117
    %1282 = vmatpush1.bf16.msra.mxu0 %v1116
    %1283 = vmatprep.subr.bf16.mxu0 %v1121
    %1284 = vmatpush1.bf16.msra.mxu0 %v1120
    %1285 = vmatprep.subr.bf16.mxu0 %v1125
    %1286 = vmatpush1.bf16.msra.mxu0 %v1124
    %1287 = vmatprep.subr.bf16.mxu0 %v1129
    %1288 = vmatpush1.bf16.msra.mxu0 %v1128
    %1289 = vmatprep.subr.bf16.mxu0 %v1133
    %1290 = vmatpush1.bf16.msra.mxu0 %v1132
    %1291 = vmatprep.subr.bf16.mxu0 %v1137
    %1292 = vmatpush1.bf16.msra.mxu0 %v1136
    %1293 = vmatprep.subr.bf16.mxu0 %v1141
    %1294 = vmatpush1.bf16.msra.mxu0 %v1140
    %1295 = vmatprep.subr.bf16.mxu0 %v1145
    %1296 = vmatpush1.bf16.msra.mxu0 %v1144
    %1297 = vmatprep.subr.bf16.mxu0 %v1149
    %1298 = vmatpush1.bf16.msra.mxu0 %v1148
    %1299 = vmatprep.subr.bf16.mxu0 %v1153
    %1300 = vmatpush1.bf16.msra.mxu0 %v1152
    %1301 = vmatprep.subr.bf16.mxu0 %v1157
    %1302 = vmatpush1.bf16.msra.mxu0 %v1156
    %1303 = vmatprep.subr.bf16.mxu0 %v1161
    %1304 = vmatpush1.bf16.msra.mxu0 %v1160
    %1305 = vmatprep.subr.bf16.mxu0 %v1165
    %1306 = vmatpush1.bf16.msra.mxu0 %v1164
    %1307 = vmatprep.subr.bf16.mxu0 %v1169
    %1308 = vmatpush1.bf16.msra.mxu0 %v1168
    %1309 = vmatprep.subr.bf16.mxu0 %v1173
    %1310 = vmatpush1.bf16.msra.mxu0 %v1172
    %1311 = vmatprep.mubr.bf16.mxu0 %v915
    %1312 = vmatmul.mubr.bf16.gmra.mrb[0].mxu0 %v914
    %v1313 = vpop.f32.mrb[0].mxu0
    %v1314 = vadd.f32 %v902, %v1313
    %v1315 = vpop.f32.mrb[0].mxu0
    %v1316 = vadd.f32 %v906, %v1315
    %v1317 = vpop.f32.mrb[0].mxu0
    %v1318 = vpop.f32.mrb[0].mxu0
    %1319 = vdwg.mxu0
    %v1320 = vxor.u32 %v1273, 2147483648
    %v1321 = vmul.f32 %v1320, 1.442695
    %v1322 = vpow.pop %v1321
    %v1323 = vadd.f32 %v1322, 1.0
    %v1324 = vrcp.pop %v1323
    %v1325 = vmul.f32 1.0, %v1324
    %v1326 = vxor.u32 %v1275, 2147483648
    %v1327 = vmul.f32 %v1326, 1.442695
    %v1328 = vpow.pop %v1327
    %v1329 = vadd.f32 %v1328, 1.0
    %v1330 = vrcp.pop %v1329
    %v1331 = vmul.f32 1.0, %v1330
    %v1332 = vtanh.pop %v1314
    %v1333 = vxor.u32 %v1316, 2147483648
    %v1334 = vmul.f32 %v1333, 1.442695
    %v1335 = vpow.pop %v1334
    %v1336 = vadd.f32 %v1335, 1.0
    %v1337 = vrcp.pop %v1336
    %v1338 = vmul.f32 1.0, %v1337
    %v1339 = vmul.f32 %v1331, %v819
    %v1340 = vmul.f32 %v1325, %v1332
    %v1341 = vadd.f32 %v1339, %v1340
    %v1342 = vtanh.pop %v1341
    %v1343 = vmul.f32 %v1338, %v1342
    %s1344 = scalar_lea.vmem [#allocation13], 8
    %1345 = vst [vmem:[%s1344] sm:$0xff] %v1343
    %s1346 = scalar_lea.vmem [#allocation15], 8
    %1347 = vst [vmem:[%s1346] sm:$0xff] %v1341
    %v1348 = vpack.c.bf16 %v1343, %v1343
    %v1349 = vld [vmem:[#allocation11] sm:$0xff]
    %v1350 = vld [vmem:[#allocation11 + $0x8] sm:$0xff]
    %v1351 = vld [vmem:[#allocation11 + $0x10] sm:$0xff]
    %v1352 = vld [vmem:[#allocation11 + $0x18] sm:$0xff]
    %v1353 = vld [vmem:[#allocation11 + $0x20] sm:$0xff]
    %v1354 = vld [vmem:[#allocation11 + $0x28] sm:$0xff]
    %v1355 = vld [vmem:[#allocation11 + $0x30] sm:$0xff]
    %v1356 = vld [vmem:[#allocation11 + $0x38] sm:$0xff]
    %v1357 = vld [vmem:[#allocation11 + $0x40] sm:$0xff]
    %v1358 = vld [vmem:[#allocation11 + $0x48] sm:$0xff]
    %v1359 = vld [vmem:[#allocation11 + $0x50] sm:$0xff]
    %v1360 = vld [vmem:[#allocation11 + $0x58] sm:$0xff]
    %v1361 = vld [vmem:[#allocation11 + $0x60] sm:$0xff]
    %v1362 = vld [vmem:[#allocation11 + $0x68] sm:$0xff]
    %v1363 = vld [vmem:[#allocation11 + $0x70] sm:$0xff]
    %v1364 = vld [vmem:[#allocation11 + $0x78] sm:$0xff]
    %v1365 = vld [vmem:[%s7] sm:$0x3]
    %v1367 = vlaneseq
    %v1368 = vshrl.u32 %v1367, 7
    %v1369 = vsub.s32 0, %v1368
    %v1370 = vrot.slane %v1365, %v1369
    %v1371 = vlaneseq
    %v1372 = vshrl.u32 %v1371, 7
    %v1373 = vsub.s32 1, %v1372
    %v1374 = vrot.slane %v1365, %v1373
    %v1393 = vunpack.c.l.b16 %v1349
    %v1394 = vunpack.c.h.b16 %v1349
    %v1395 = vunpack.c.l.b16 %v1350
    %v1396 = vunpack.c.h.b16 %v1350
    %v1397 = vunpack.c.l.b16 %v1351
    %v1398 = vunpack.c.h.b16 %v1351
    %v1399 = vunpack.c.l.b16 %v1352
    %v1400 = vunpack.c.h.b16 %v1352
    %v1401 = vunpack.c.l.b16 %v1353
    %v1402 = vunpack.c.h.b16 %v1353
    %v1403 = vunpack.c.l.b16 %v1354
    %v1404 = vunpack.c.h.b16 %v1354
    %v1405 = vunpack.c.l.b16 %v1355
    %v1406 = vunpack.c.h.b16 %v1355
    %v1407 = vunpack.c.l.b16 %v1356
    %v1408 = vunpack.c.h.b16 %v1356
    %v1409 = vunpack.c.l.b16 %v1357
    %v1410 = vunpack.c.h.b16 %v1357
    %v1411 = vunpack.c.l.b16 %v1358
    %v1412 = vunpack.c.h.b16 %v1358
    %v1413 = vunpack.c.l.b16 %v1359
    %v1414 = vunpack.c.h.b16 %v1359
    %v1415 = vunpack.c.l.b16 %v1360
    %v1416 = vunpack.c.h.b16 %v1360
    %v1417 = vunpack.c.l.b16 %v1361
    %v1418 = vunpack.c.h.b16 %v1361
    %v1419 = vunpack.c.l.b16 %v1362
    %v1420 = vunpack.c.h.b16 %v1362
    %v1421 = vunpack.c.l.b16 %v1363
    %v1422 = vunpack.c.h.b16 %v1363
    %v1423 = vunpack.c.l.b16 %v1364
    %v1424 = vunpack.c.h.b16 %v1364
    %v1425 = vpack.c.b16 %v1395, %v1393
    %v1426 = vpack.c.b16 %v1396, %v1394
    %v1427 = vpack.c.b16 %v1399, %v1397
    %v1428 = vpack.c.b16 %v1400, %v1398
    %v1429 = vpack.c.b16 %v1403, %v1401
    %v1430 = vpack.c.b16 %v1404, %v1402
    %v1431 = vpack.c.b16 %v1407, %v1405
    %v1432 = vpack.c.b16 %v1408, %v1406
    %v1433 = vpack.c.b16 %v1411, %v1409
    %v1434 = vpack.c.b16 %v1412, %v1410
    %v1435 = vpack.c.b16 %v1415, %v1413
    %v1436 = vpack.c.b16 %v1416, %v1414
    %v1437 = vpack.c.b16 %v1419, %v1417
    %v1438 = vpack.c.b16 %v1420, %v1418
    %v1439 = vpack.c.b16 %v1423, %v1421
    %v1440 = vpack.c.b16 %v1424, %v1422
    %1457 = vmatprep.subr.bf16.mxu0 %v1426
    %1458 = vmatpush1.bf16.msra.mxu0 %v1425
    %1459 = vmatprep.subr.bf16.mxu0 %v1428
    %1460 = vmatpush1.bf16.msra.mxu0 %v1427
    %1461 = vmatprep.subr.bf16.mxu0 %v1430
    %1462 = vmatpush1.bf16.msra.mxu0 %v1429
    %1463 = vmatprep.subr.bf16.mxu0 %v1432
    %1464 = vmatpush1.bf16.msra.mxu0 %v1431
    %1465 = vmatprep.subr.bf16.mxu0 %v1434
    %1466 = vmatpush1.bf16.msra.mxu0 %v1433
    %1467 = vmatprep.subr.bf16.mxu0 %v1436
    %1468 = vmatpush1.bf16.msra.mxu0 %v1435
    %1469 = vmatprep.subr.bf16.mxu0 %v1438
    %1470 = vmatpush1.bf16.msra.mxu0 %v1437
    %1471 = vmatprep.subr.bf16.mxu0 %v1440
    %1472 = vmatpush1.bf16.msra.mxu0 %v1439
    %1473 = vmatprep.subr.bf16.mxu0 0
    %1474 = vmatpush1.bf16.msra.mxu0 0
    %1475 = vmatprep.subr.bf16.mxu0 0
    %1476 = vmatpush1.bf16.msra.mxu0 0
    %1477 = vmatprep.subr.bf16.mxu0 0
    %1478 = vmatpush1.bf16.msra.mxu0 0
    %1479 = vmatprep.subr.bf16.mxu0 0
    %1480 = vmatpush1.bf16.msra.mxu0 0
    %1481 = vmatprep.subr.bf16.mxu0 0
    %1482 = vmatpush1.bf16.msra.mxu0 0
    %1483 = vmatprep.subr.bf16.mxu0 0
    %1484 = vmatpush1.bf16.msra.mxu0 0
    %1485 = vmatprep.subr.bf16.mxu0 0
    %1486 = vmatpush1.bf16.msra.mxu0 0
    %1487 = vmatprep.subr.bf16.mxu0 0
    %1488 = vmatpush1.bf16.msra.mxu0 0
    %1489 = vmatprep.mubr.bf16.mxu0 0
    %1490 = vmatmul.mubr.bf16.gmra.mrb[0].mxu0 %v1348
    %v1491 = vpop.f32.mrb[0].mxu0
    %v1492 = vadd.f32 %v1370, %v1491
    %v1493 = vpop.f32.mrb[0].mxu0
    %v1494 = vadd.f32 %v1374, %v1493
    %v1495 = vpop.f32.mrb[0].mxu0
    %v1496 = vpop.f32.mrb[0].mxu0
    %1497 = vdwg.mxu0
    %1498 = vst [vmem:[#allocation12] sm:$0xff] %v1492
    %1499 = vst [vmem:[#allocation12 + $0x8] sm:$0xff] %v1494
    // Predicated region
    $region54: #{decoder_forward.1} parent=1 // pred_check
      _
    $region55: #{decoder_forward.1} parent=1 // pred_check_branch
      %1501 = sbr.rel (0) target = $region57
    $region56: #{decoder_forward.1} parent=1 // pred_region
      %s1503 = ssub.s32 256, 256
      %1504 = vsyncadd [#allocation5], %s1503
      %s1506 = sshll.u32 [#allocation12], 4
      %s1507 = int_to_ptr.vmem [resolvable:$true] %s1506
      %1509 = dma.vmem_to_hbm [thread:$0]  %s1507, 256, %s8, [#allocation5]
    $region57: #{decoder_forward.1} parent=1 // pred_fallthru
      _
    // Predicated region
    $region58: #{decoder_forward.1} parent=1 // pred_check
      _
    $region59: #{decoder_forward.1} parent=1 // pred_check_branch
      %1511 = sbr.rel (0) target = $region61
    $region60: #{decoder_forward.1} parent=1 // pred_region
      %s1513 = ssub.s32 256, 256
      %1514 = vsyncadd [#allocation14], %s1513
      %s1515 = sshll.u32 [#allocation13], 4
      %s1516 = int_to_ptr.vmem [resolvable:$true] %s1515
      %1521 = dma.vmem_to_hbm [thread:$0]  %s1516, 256, %s9, [#allocation14], 128, 128, 8
    $region61: #{decoder_forward.1} parent=1 // pred_fallthru
      _
    // Predicated region
    $region62: #{decoder_forward.1} parent=1 // pred_check
      _
    $region63: #{decoder_forward.1} parent=1 // pred_check_branch
      %1523 = sbr.rel (0) target = $region65
    $region64: #{decoder_forward.1} parent=1 // pred_region
      %s1525 = ssub.s32 256, 256
      %1526 = vsyncadd [#allocation14], %s1525
      %s1527 = sshll.u32 [#allocation15], 4
      %s1528 = int_to_ptr.vmem [resolvable:$true] %s1527
      %1533 = dma.vmem_to_hbm [thread:$0]  %s1528, 256, %s10, [#allocation14], 128, 128, 8
    $region65: #{decoder_forward.1} parent=1 // pred_fallthru
      _
    // Predicated region
    $region66: #{decoder_forward.1} parent=1 // pred_check
      _
    $region67: #{decoder_forward.1} parent=1 // pred_check_branch
      %1535 = sbr.rel (0) target = $region69
    $region68: #{decoder_forward.1} parent=1 // pred_region
      %1536 = dma.done [#allocation5], 256
    $region69: #{decoder_forward.1} parent=1 // pred_fallthru
      _
    // Predicated region
    $region70: #{decoder_forward.1} parent=1 // pred_check
      _
    $region71: #{decoder_forward.1} parent=1 // pred_check_branch
      %1538 = sbr.rel (0) target = $region73
    $region72: #{decoder_forward.1} parent=1 // pred_region
      %1539 = dma.done [#allocation14], 256
    $region73: #{decoder_forward.1} parent=1 // pred_fallthru
      _
    // Predicated region
    $region74: #{decoder_forward.1} parent=1 // pred_check
      _
    $region75: #{decoder_forward.1} parent=1 // pred_check_branch
      %1541 = sbr.rel (0) target = $region77
    $region76: #{decoder_forward.1} parent=1 // pred_region
      %1542 = dma.done [#allocation14], 256
    $region77: #{decoder_forward.1} parent=1 // pred_fallthru
      _
    %1543 = vsyncpa [#allocation4], 1
    %1544 = vsyncpa [#allocation7], 1
    %1545 = vsyncpa [#allocation10], 1
    %1546 = vsyncpa [#allocation5], 1
    %1547 = vsyncpa [#allocation14], 1

</llo_original>
